<compile_context>
chip_gen: v5e
topology: v5e:2x2
jax: 0.10.0
libtpu: 0.0.40
codegen_flags: <defaults>
</compile_context>

<pallas_src>
import functools

import jax
import jax.numpy as jnp
from jax.experimental import pallas as pl
from jax.experimental.pallas import tpu as pltpu


_LANE = 128
_MXU_ROWS = 256                      # v6e/v7x MXU tile height (multiple of v5e's 128)
_DEFAULT_SCOPED_VMEM = 16 * 1024 * 1024   # v5e default scoped-VMEM limit

# Flipped to False at runtime if this jax/mosaic build rejects single-buffered
# (pl.Buffered(1)) resident weights.
_RESIDENT_SINGLE_BUFFER_OK = True


def _round_up(n, m):
    return ((n + m - 1) // m) * m


# ----------------------------------------------------------------------------
# Kernel: whole VAE forward (encode -> sample -> decode) for one batch tile.
# ----------------------------------------------------------------------------
def _vae_forward_kernel(*refs, n_in, enc_hidden, dec_hidden, latent_pad,
                        compute_dtype):
    in_refs = refs[:n_in]
    xr_ref, lat_ref = refs[n_in:]

    it = iter(in_refs)
    x_ref = next(it)
    eps_ref = next(it)
    w_ei_ref, b_ei_ref = next(it), next(it)
    if enc_hidden > 0:
        w_eh_ref, b_eh_ref = next(it), next(it)
    w_head_ref, b_head_ref = next(it), next(it)          # fused mu || logvar head
    w_di_ref, b_di_ref = next(it), next(it)
    if dec_hidden > 0:
        w_dh_ref, b_dh_ref = next(it), next(it)
    w_do_ref, b_do_ref = next(it), next(it)

    f32 = jnp.float32
    cdt = compute_dtype

    def linear(a, w, b):
        # MXU matmul in the storage dtype (bf16 by default), f32 accumulation,
        # f32 bias add.
        y = jnp.dot(a, w, preferred_element_type=f32)
        return y + b

    def linear_relu(a, w, b):
        # ReLU is exact in bf16; keep inter-layer activations in the MXU dtype
        # so no extra cast is needed before the next matmul.
        return jnp.maximum(linear(a, w, b), 0.0).astype(cdt)

    # ---- encoder ----
    h = linear_relu(x_ref[...], w_ei_ref[...], b_ei_ref[...])
    for i in range(enc_hidden):                          # static unroll (small L)
        h = linear_relu(h, w_eh_ref[i], b_eh_ref[i])

    # fused mean / logvar projection: one MXU pass, 128-aligned split.
    head = linear(h, w_head_ref[...], b_head_ref[...])   # f32 (tb, 2*L_p)
    mu = head[:, :latent_pad]
    lv = head[:, latent_pad:]

    # ---- reparameterization: z = mu + exp(logvar / 2) * eps  (f32) ----
    z = mu + jnp.exp(lv * 0.5) * eps_ref[...].astype(f32)

    # ---- decoder ----
    d = linear_relu(z.astype(cdt), w_di_ref[...], b_di_ref[...])
    for i in range(dec_hidden):                          # static unroll (small L)
        d = linear_relu(d, w_dh_ref[i], b_dh_ref[i])
    logits = linear(d, w_do_ref[...], b_do_ref[...])

    # ---- lane-dense stores: one (tb, D_p) slab + one fused (tb, 3*L_p) slab ----
    xr_ref[...] = jax.nn.sigmoid(logits).astype(xr_ref.dtype)
    lat_ref[...] = jnp.concatenate([head, z], axis=-1).astype(lat_ref.dtype)


# ----------------------------------------------------------------------------
# Parameter construction (deterministic, PyTorch-like uniform init).
# Weights are stored pre-transposed: (in_features, out_features).
# ----------------------------------------------------------------------------
def _linear_params(key, fan_in, fan_out):
    kw, kb = jax.random.split(key)
    bound = 1.0 / jnp.sqrt(jnp.float32(fan_in))
    w_t = jax.random.uniform(kw, (fan_in, fan_out), jnp.float32, -bound, bound)
    b = jax.random.uniform(kb, (1, fan_out), jnp.float32, -bound, bound)
    return w_t, b


def init_vae_params(key, input_size, enc_num_hidden_layers, dec_num_hidden_layers,
                    enc_latent_size, dec_latent_size, latent_dim):
    n_keys = 6 + enc_num_hidden_layers + dec_num_hidden_layers
    ki = iter(jax.random.split(key, n_keys))

    p = {}
    p["w_ei"], p["b_ei"] = _linear_params(next(ki), input_size, enc_latent_size)
    if enc_num_hidden_layers > 0:
        eh = [_linear_params(next(ki), enc_latent_size, enc_latent_size)
              for _ in range(enc_num_hidden_layers)]
        p["w_eh"] = jnp.stack([w for w, _ in eh])
        p["b_eh"] = jnp.stack([b for _, b in eh])
    p["w_mu"], p["b_mu"] = _linear_params(next(ki), enc_latent_size, latent_dim)
    p["w_lv"], p["b_lv"] = _linear_params(next(ki), enc_latent_size, latent_dim)
    p["w_di"], p["b_di"] = _linear_params(next(ki), latent_dim, dec_latent_size)
    if dec_num_hidden_layers > 0:
        dh = [_linear_params(next(ki), dec_latent_size, dec_latent_size)
              for _ in range(dec_num_hidden_layers)]
        p["w_dh"] = jnp.stack([w for w, _ in dh])
        p["b_dh"] = jnp.stack([b for _, b in dh])
    p["w_do"], p["b_do"] = _linear_params(next(ki), dec_latent_size, input_size)
    return p


# ----------------------------------------------------------------------------
# One-time packing: lane-pad to multiples of 128, fuse mu||logvar head, cast
# weights to the MXU storage dtype (bf16 default).  Zero padding is exact.
# Biases stay f32 (added to the f32 accumulator).
# ----------------------------------------------------------------------------
def pack_vae_params(params, *, input_size, latent_dim, enc_latent_size,
                    dec_latent_size, enc_num_hidden_layers, dec_num_hidden_layers,
                    weight_dtype=jnp.bfloat16):
    d_p = _round_up(input_size, _LANE)
    he_p = _round_up(enc_latent_size, _LANE)
    hd_p = _round_up(dec_latent_size, _LANE)
    l_p = _round_up(latent_dim, _LANE)

    def pad2(a, r, c):
        return jnp.pad(a, ((0, r - a.shape[0]), (0, c - a.shape[1])))

    def pad3(a, r, c):
        return jnp.pad(a, ((0, 0), (0, r - a.shape[1]), (0, c - a.shape[2])))

    wd = weight_dtype
    pk = {}
    pk["w_ei"] = pad2(params["w_ei"], d_p, he_p).astype(wd)
    pk["b_ei"] = pad2(params["b_ei"], 1, he_p).astype(jnp.float32)
    if enc_num_hidden_layers > 0:
        pk["w_eh"] = pad3(params["w_eh"], he_p, he_p).astype(wd)
        pk["b_eh"] = pad3(params["b_eh"], 1, he_p).astype(jnp.float32)
    # fused mu || logvar head: (He_p, 2*L_p)
    pk["w_head"] = jnp.concatenate(
        [pad2(params["w_mu"], he_p, l_p), pad2(params["w_lv"], he_p, l_p)],
        axis=1).astype(wd)
    pk["b_head"] = jnp.concatenate(
        [pad2(params["b_mu"], 1, l_p), pad2(params["b_lv"], 1, l_p)],
        axis=1).astype(jnp.float32)
    pk["w_di"] = pad2(params["w_di"], l_p, hd_p).astype(wd)
    pk["b_di"] = pad2(params["b_di"], 1, hd_p).astype(jnp.float32)
    if dec_num_hidden_layers > 0:
        pk["w_dh"] = pad3(params["w_dh"], hd_p, hd_p).astype(wd)
        pk["b_dh"] = pad3(params["b_dh"], 1, hd_p).astype(jnp.float32)
    pk["w_do"] = pad2(params["w_do"], hd_p, d_p).astype(wd)
    pk["b_do"] = pad2(params["b_do"], 1, d_p).astype(jnp.float32)

    dims = dict(D_p=d_p, He_p=he_p, Hd_p=hd_p, L_p=l_p)
    return pk, dims


# ----------------------------------------------------------------------------
# BlockSpec helpers
# ----------------------------------------------------------------------------
def _resident_spec(shape, use_buffered):
    """VMEM-resident block (constant index_map); single-buffered if supported."""
    nd = len(shape)
    index_map = lambda i: (0,) * nd
    if use_buffered:
        try:
            # Resident weights never change across grid steps -> one buffer.
            return pl.BlockSpec(shape, index_map, pipeline_mode=pl.Buffered(1))
        except Exception:
            pass
    return pl.BlockSpec(shape, index_map)


# ----------------------------------------------------------------------------
# Wrapper: mirrors VAE.forward(x) -> (x_recon, mu, logvar, z)
# ----------------------------------------------------------------------------
def vae_forward(x, eps, packed, dims, *, input_size, latent_dim,
                enc_num_hidden_layers, dec_num_hidden_layers,
                batch_tile=512, interpret=False):
    global _RESIDENT_SINGLE_BUFFER_OK

    d_p, he_p, hd_p, l_p = dims["D_p"], dims["He_p"], dims["Hd_p"], dims["L_p"]
    cdt = jnp.dtype(packed["w_ei"].dtype)     # MXU / streaming dtype (bf16 or f32)

    # Equivalent of x.view(-1, input_size)
    x2 = x.reshape(-1, input_size)
    batch = x2.shape[0]
    assert eps.shape == (batch, latent_dim)

    # Batch tile: MXU-row aligned for large batches; >=2 grid steps for large
    # batches so dimension_semantics=("parallel",) shards across v7x's 2 TCs.
    b_al = _round_up(batch, 8)
    if b_al <= _MXU_ROWS:
        tb = b_al
    else:
        half = _round_up((b_al + 1) // 2, _MXU_ROWS)
        tb = max(_MXU_ROWS, min(_round_up(batch_tile, _MXU_ROWS), half))
    b_pad = _round_up(b_al, tb)

    # Single jnp.pad (no zeros+scatter); zero padding is numerically exact.
    x_p = jnp.pad(x2.astype(cdt), ((0, b_pad - batch), (0, d_p - input_size)))
    eps_p = jnp.pad(eps.astype(cdt), ((0, b_pad - batch), (0, l_p - latent_dim)))

    # Ordered weight list (dummy zero stacks are never built or DMA'd).
    weight_names = ["w_ei", "b_ei"]
    if enc_num_hidden_layers > 0:
        weight_names += ["w_eh", "b_eh"]
    weight_names += ["w_head", "b_head", "w_di", "b_di"]
    if dec_num_hidden_layers > 0:
        weight_names += ["w_dh", "b_dh"]
    weight_names += ["w_do", "b_do"]
    weights = [packed[n] for n in weight_names]
    # TODO(synk): for very large hidden widths whose resident weight set exceeds
    # ~40 MiB (v7x has 64 MiB VMEM/TC), stream w_eh/w_dh over a second grid axis
    # (or pltpu.emit_pipeline) instead of keeping everything resident.

    inputs = (x_p, eps_p, *weights)
    n_in = len(inputs)
    grid = (b_pad // tb,)

    kernel = functools.partial(
        _vae_forward_kernel, n_in=n_in,
        enc_hidden=enc_num_hidden_layers, dec_hidden=dec_num_hidden_layers,
        latent_pad=l_p, compute_dtype=cdt)

    out_shape = (
        jax.ShapeDtypeStruct((b_pad, d_p), jnp.float32),       # x_recon (padded)
        jax.ShapeDtypeStruct((b_pad, 3 * l_p), jnp.float32),   # mu||logvar||z
    )

    def batch_spec(cols):
        return pl.BlockSpec((tb, cols), lambda i: (i, 0))

    def run(use_buffered):
        in_specs = ([batch_spec(d_p), batch_spec(l_p)]
                    + [_resident_spec(w.shape, use_buffered) for w in weights])
        out_specs = (batch_spec(d_p), batch_spec(3 * l_p))

        # VMEM budget: resident weights (x1 if single-buffered, x2 otherwise)
        # + double-buffered streamed I/O tiles + activation headroom.  Raise
        # the scoped limit only when needed; cap at 3/4 of physical VMEM
        # (~48 MiB on v7x, ~96 MiB on v5e/v6e).
        weight_bytes = sum(int(w.size) * w.dtype.itemsize for w in weights)
        in_tile = tb * (d_p + l_p) * cdt.itemsize
        out_tile = tb * (d_p + 3 * l_p) * 4
        act = 6 * tb * max(d_p, he_p, hd_p, 3 * l_p) * 4
        est = ((1 if use_buffered else 2) * weight_bytes
               + 2 * (in_tile + out_tile) + act)

        compiler_kwargs = dict(dimension_semantics=("parallel",))
        if est > _DEFAULT_SCOPED_VMEM:
            try:
                cap = int(getattr(pltpu.get_tpu_info(), "vmem_capacity_bytes",
                                  64 * 1024 * 1024))
            except Exception:
                cap = 64 * 1024 * 1024        # v7x-safe assumption
            limit = min(int(est * 1.25), (cap * 3) // 4)
            compiler_kwargs["vmem_limit_bytes"] = max(limit, _DEFAULT_SCOPED_VMEM)

        outs = pl.pallas_call(
            kernel,
            grid=grid,
            out_shape=out_shape,
            in_specs=in_specs,
            out_specs=out_specs,
            compiler_params=pltpu.CompilerParams(**compiler_kwargs),
            interpret=interpret,
        )(*inputs)
        jax.block_until_ready(outs)
        return outs

    if _RESIDENT_SINGLE_BUFFER_OK:
        try:
            xr, lat = run(use_buffered=True)
        except Exception:
            # This jax/mosaic build rejects single-buffered resident blocks;
            # fall back to the default double-buffered resident weights.
            _RESIDENT_SINGLE_BUFFER_OK = False
            xr, lat = run(use_buffered=False)
    else:
        xr, lat = run(use_buffered=False)

    # Strip batch / lane padding and split the fused latent slab (exact: padded
    # rows/cols never mix into the valid region).
    x_recon = xr[:batch, :input_size]
    mu = lat[:batch, 0:latent_dim]
    logvar = lat[:batch, l_p:l_p + latent_dim]
    z = lat[:batch, 2 * l_p:2 * l_p + latent_dim]
    return x_recon, mu, logvar, z


# ----------------------------------------------------------------------------
# Pure-JAX f32 reference (un-padded, un-fused) for a sanity check.
# ----------------------------------------------------------------------------
def vae_forward_ref(x, eps, params, *, input_size, enc_num_hidden_layers,
                    dec_num_hidden_layers):
    x2 = x.reshape(-1, input_size).astype(jnp.float32)
    h = jax.nn.relu(x2 @ params["w_ei"] + params["b_ei"])
    for i in range(enc_num_hidden_layers):
        h = jax.nn.relu(h @ params["w_eh"][i] + params["b_eh"][i])
    mu = h @ params["w_mu"] + params["b_mu"]
    lv = h @ params["w_lv"] + params["b_lv"]
    z = mu + jnp.exp(lv / 2.0) * eps
    d = jax.nn.relu(z @ params["w_di"] + params["b_di"])
    for i in range(dec_num_hidden_layers):
        d = jax.nn.relu(d @ params["w_dh"][i] + params["b_dh"][i])
    xr = jax.nn.sigmoid(d @ params["w_do"] + params["b_do"])
    return xr, mu, lv, z


if __name__ == "__main__":
    # Small config consistent with the module constructor.
    input_size = 64
    enc_num_hidden_layers = 2
    dec_num_hidden_layers = 2
    enc_latent_size = 32
    dec_latent_size = 32
    latent_dim = 16
    batch = 8

    key = jax.random.PRNGKey(0)
    k_x, k_eps, k_params = jax.random.split(key, 3)

    x = jax.random.normal(k_x, (batch, input_size), jnp.float32)
    eps = jax.random.normal(k_eps, (batch, latent_dim), jnp.float32)

    params = init_vae_params(
        k_params, input_size, enc_num_hidden_layers, dec_num_hidden_layers,
        enc_latent_size, dec_latent_size, latent_dim,
    )

    refs = vae_forward_ref(
        x, eps, params, input_size=input_size,
        enc_num_hidden_layers=enc_num_hidden_layers,
        dec_num_hidden_layers=dec_num_hidden_layers,
    )

    # Exercise both precision paths: f32 weights (tight check) and the bf16
    # default (MXU-native performance path -> looser tolerance by design).
    for wd, tol in ((jnp.float32, 1e-4), (jnp.bfloat16, 1e-1)):
        packed, dims = pack_vae_params(
            params, input_size=input_size, latent_dim=latent_dim,
            enc_latent_size=enc_latent_size, dec_latent_size=dec_latent_size,
            enc_num_hidden_layers=enc_num_hidden_layers,
            dec_num_hidden_layers=dec_num_hidden_layers,
            weight_dtype=wd,
        )
        outs = vae_forward(
            x, eps, packed, dims,
            input_size=input_size, latent_dim=latent_dim,
            enc_num_hidden_layers=enc_num_hidden_layers,
            dec_num_hidden_layers=dec_num_hidden_layers,
        )
        jax.block_until_ready(outs)
        for got, want, name in zip(outs, refs, ("x_recon", "mu", "logvar", "z")):
            err = float(jnp.max(jnp.abs(got.astype(jnp.float32) - want)))
            assert err <= tol, (
                f"{name} mismatch (weight_dtype={jnp.dtype(wd).name}): "
                f"max_abs_err={err}")

    # TODO(synk): loss_function / ELBO (torch.distributions) is not part of
    # forward() and is left to host-side JAX.
    print("KERNEL_OK")
</pallas_src>

<mosaic_0001>
module attributes {stable_mosaic.version = 11 : i64} {
  func.func @_vae_forward_kernel(%arg0: i32, %arg1: memref<8x128xf32, #tpu.memory_space<vmem>>, %arg2: memref<8x128xf32, #tpu.memory_space<vmem>>, %arg3: memref<128x128xf32, #tpu.memory_space<vmem>>, %arg4: memref<1x128xf32, #tpu.memory_space<vmem>>, %arg5: memref<2x128x128xf32, #tpu.memory_space<vmem>>, %arg6: memref<2x1x128xf32, #tpu.memory_space<vmem>>, %arg7: memref<128x256xf32, #tpu.memory_space<vmem>>, %arg8: memref<1x256xf32, #tpu.memory_space<vmem>>, %arg9: memref<128x128xf32, #tpu.memory_space<vmem>>, %arg10: memref<1x128xf32, #tpu.memory_space<vmem>>, %arg11: memref<2x128x128xf32, #tpu.memory_space<vmem>>, %arg12: memref<2x1x128xf32, #tpu.memory_space<vmem>>, %arg13: memref<128x128xf32, #tpu.memory_space<vmem>>, %arg14: memref<1x128xf32, #tpu.memory_space<vmem>>, %arg15: memref<8x128xf32, #tpu.memory_space<vmem>>, %arg16: memref<8x384xf32, #tpu.memory_space<vmem>>) attributes {dimension_semantics = [#tpu.dimension_semantics<parallel>], iteration_bounds = array<i64: 1>, scalar_prefetch = 0 : i64, scratch_operands = 0 : i64, tpu.core_type = #tpu.core_type<tc>, window_params = [{transform_indices = @transform_0, window_bounds = array<i64: 8, 128>}, {transform_indices = @transform_1, window_bounds = array<i64: 8, 128>}, {pipeline_mode = #tpu.pipeline_mode<synchronous>, transform_indices = @transform_2, window_bounds = array<i64: 128, 128>}, {pipeline_mode = #tpu.pipeline_mode<synchronous>, transform_indices = @transform_3, window_bounds = array<i64: 1, 128>}, {pipeline_mode = #tpu.pipeline_mode<synchronous>, transform_indices = @transform_4, window_bounds = array<i64: 2, 128, 128>}, {pipeline_mode = #tpu.pipeline_mode<synchronous>, transform_indices = @transform_5, window_bounds = array<i64: 2, 1, 128>}, {pipeline_mode = #tpu.pipeline_mode<synchronous>, transform_indices = @transform_6, window_bounds = array<i64: 128, 256>}, {pipeline_mode = #tpu.pipeline_mode<synchronous>, transform_indices = @transform_7, window_bounds = array<i64: 1, 256>}, {pipeline_mode = #tpu.pipeline_mode<synchronous>, transform_indices = @transform_8, window_bounds = array<i64: 128, 128>}, {pipeline_mode = #tpu.pipeline_mode<synchronous>, transform_indices = @transform_9, window_bounds = array<i64: 1, 128>}, {pipeline_mode = #tpu.pipeline_mode<synchronous>, transform_indices = @transform_10, window_bounds = array<i64: 2, 128, 128>}, {pipeline_mode = #tpu.pipeline_mode<synchronous>, transform_indices = @transform_11, window_bounds = array<i64: 2, 1, 128>}, {pipeline_mode = #tpu.pipeline_mode<synchronous>, transform_indices = @transform_12, window_bounds = array<i64: 128, 128>}, {pipeline_mode = #tpu.pipeline_mode<synchronous>, transform_indices = @transform_13, window_bounds = array<i64: 1, 128>}, {transform_indices = @transform_14, window_bounds = array<i64: 8, 128>}, {transform_indices = @transform_15, window_bounds = array<i64: 8, 384>}]} {
    %c0 = arith.constant 0 : index
    %c0_0 = arith.constant 0 : index
    %0 = vector.load %arg1[%c0, %c0_0] : memref<8x128xf32, #tpu.memory_space<vmem>>, vector<8x128xf32>
    %c0_1 = arith.constant 0 : index
    %c0_2 = arith.constant 0 : index
    %1 = vector.load %arg3[%c0_1, %c0_2] : memref<128x128xf32, #tpu.memory_space<vmem>>, vector<128x128xf32>
    %c0_3 = arith.constant 0 : index
    %c0_4 = arith.constant 0 : index
    %2 = vector.load %arg4[%c0_3, %c0_4] : memref<1x128xf32, #tpu.memory_space<vmem>>, vector<1x128xf32>
    %cst = arith.constant dense<0.000000e+00> : vector<8x128xf32>
    %3 = tpu.matmul %0, %1, %cst {dimension_numbers = #tpu.dot_dimension_numbers<[1], [0], [0], [1], [0, 0, 1, 1], [], []>} : vector<8x128xf32>, vector<128x128xf32>, vector<8x128xf32> -> vector<8x128xf32>
    %4 = vector.broadcast %2 : vector<1x128xf32> to vector<8x128xf32>
    %5 = arith.addf %3, %4 : vector<8x128xf32>
    %cst_5 = arith.constant 0.000000e+00 : f32
    %6 = vector.broadcast %cst_5 : f32 to vector<8x128xf32>
    %7 = arith.maximumf %5, %6 : vector<8x128xf32>
    %c0_6 = arith.constant 0 : index
    %c0_7 = arith.constant 0 : index
    %c0_8 = arith.constant 0 : index
    %8 = vector.load %arg5[%c0_6, %c0_7, %c0_8] : memref<2x128x128xf32, #tpu.memory_space<vmem>>, vector<1x128x128xf32>
    %9 = vector.shape_cast %8 : vector<1x128x128xf32> to vector<128x128xf32>
    %c0_9 = arith.constant 0 : index
    %c0_10 = arith.constant 0 : index
    %c0_11 = arith.constant 0 : index
    %10 = vector.load %arg6[%c0_9, %c0_10, %c0_11] : memref<2x1x128xf32, #tpu.memory_space<vmem>>, vector<1x1x128xf32>
    %11 = vector.shape_cast %10 : vector<1x1x128xf32> to vector<1x128xf32>
    %cst_12 = arith.constant dense<0.000000e+00> : vector<8x128xf32>
    %12 = tpu.matmul %7, %9, %cst_12 {dimension_numbers = #tpu.dot_dimension_numbers<[1], [0], [0], [1], [0, 0, 1, 1], [], []>} : vector<8x128xf32>, vector<128x128xf32>, vector<8x128xf32> -> vector<8x128xf32>
    %13 = vector.broadcast %11 : vector<1x128xf32> to vector<8x128xf32>
    %14 = arith.addf %12, %13 : vector<8x128xf32>
    %cst_13 = arith.constant 0.000000e+00 : f32
    %15 = vector.broadcast %cst_13 : f32 to vector<8x128xf32>
    %16 = arith.maximumf %14, %15 : vector<8x128xf32>
    %c1 = arith.constant 1 : index
    %c0_14 = arith.constant 0 : index
    %c0_15 = arith.constant 0 : index
    %17 = vector.load %arg5[%c1, %c0_14, %c0_15] : memref<2x128x128xf32, #tpu.memory_space<vmem>>, vector<1x128x128xf32>
    %18 = vector.shape_cast %17 : vector<1x128x128xf32> to vector<128x128xf32>
    %c1_16 = arith.constant 1 : index
    %c0_17 = arith.constant 0 : index
    %c0_18 = arith.constant 0 : index
    %19 = vector.load %arg6[%c1_16, %c0_17, %c0_18] : memref<2x1x128xf32, #tpu.memory_space<vmem>>, vector<1x1x128xf32>
    %20 = vector.shape_cast %19 : vector<1x1x128xf32> to vector<1x128xf32>
    %cst_19 = arith.constant dense<0.000000e+00> : vector<8x128xf32>
    %21 = tpu.matmul %16, %18, %cst_19 {dimension_numbers = #tpu.dot_dimension_numbers<[1], [0], [0], [1], [0, 0, 1, 1], [], []>} : vector<8x128xf32>, vector<128x128xf32>, vector<8x128xf32> -> vector<8x128xf32>
    %22 = vector.broadcast %20 : vector<1x128xf32> to vector<8x128xf32>
    %23 = arith.addf %21, %22 : vector<8x128xf32>
    %cst_20 = arith.constant 0.000000e+00 : f32
    %24 = vector.broadcast %cst_20 : f32 to vector<8x128xf32>
    %25 = arith.maximumf %23, %24 : vector<8x128xf32>
    %c0_21 = arith.constant 0 : index
    %c0_22 = arith.constant 0 : index
    %26 = vector.load %arg7[%c0_21, %c0_22] : memref<128x256xf32, #tpu.memory_space<vmem>>, vector<128x256xf32>
    %c0_23 = arith.constant 0 : index
    %c0_24 = arith.constant 0 : index
    %27 = vector.load %arg8[%c0_23, %c0_24] : memref<1x256xf32, #tpu.memory_space<vmem>>, vector<1x256xf32>
    %cst_25 = arith.constant dense<0.000000e+00> : vector<8x256xf32>
    %28 = tpu.matmul %25, %26, %cst_25 {dimension_numbers = #tpu.dot_dimension_numbers<[1], [0], [0], [1], [0, 0, 1, 1], [], []>} : vector<8x128xf32>, vector<128x256xf32>, vector<8x256xf32> -> vector<8x256xf32>
    %29 = vector.broadcast %27 : vector<1x256xf32> to vector<8x256xf32>
    %30 = arith.addf %28, %29 : vector<8x256xf32>
    %31 = vector.extract_strided_slice %30 {offsets = [0, 0], sizes = [8, 128], strides = [1, 1]} : vector<8x256xf32> to vector<8x128xf32>
    %32 = vector.extract_strided_slice %30 {offsets = [0, 128], sizes = [8, 128], strides = [1, 1]} : vector<8x256xf32> to vector<8x128xf32>
    %cst_26 = arith.constant 5.000000e-01 : f32
    %33 = vector.broadcast %cst_26 : f32 to vector<8x128xf32>
    %34 = arith.mulf %32, %33 : vector<8x128xf32>
    %35 = math.exp %34 : vector<8x128xf32>
    %c0_27 = arith.constant 0 : index
    %c0_28 = arith.constant 0 : index
    %36 = vector.load %arg2[%c0_27, %c0_28] : memref<8x128xf32, #tpu.memory_space<vmem>>, vector<8x128xf32>
    %37 = arith.mulf %35, %36 : vector<8x128xf32>
    %38 = arith.addf %31, %37 : vector<8x128xf32>
    %c0_29 = arith.constant 0 : index
    %c0_30 = arith.constant 0 : index
    %39 = vector.load %arg9[%c0_29, %c0_30] : memref<128x128xf32, #tpu.memory_space<vmem>>, vector<128x128xf32>
    %c0_31 = arith.constant 0 : index
    %c0_32 = arith.constant 0 : index
    %40 = vector.load %arg10[%c0_31, %c0_32] : memref<1x128xf32, #tpu.memory_space<vmem>>, vector<1x128xf32>
    %cst_33 = arith.constant dense<0.000000e+00> : vector<8x128xf32>
    %41 = tpu.matmul %38, %39, %cst_33 {dimension_numbers = #tpu.dot_dimension_numbers<[1], [0], [0], [1], [0, 0, 1, 1], [], []>} : vector<8x128xf32>, vector<128x128xf32>, vector<8x128xf32> -> vector<8x128xf32>
    %42 = vector.broadcast %40 : vector<1x128xf32> to vector<8x128xf32>
    %43 = arith.addf %41, %42 : vector<8x128xf32>
    %cst_34 = arith.constant 0.000000e+00 : f32
    %44 = vector.broadcast %cst_34 : f32 to vector<8x128xf32>
    %45 = arith.maximumf %43, %44 : vector<8x128xf32>
    %c0_35 = arith.constant 0 : index
    %c0_36 = arith.constant 0 : index
    %c0_37 = arith.constant 0 : index
    %46 = vector.load %arg11[%c0_35, %c0_36, %c0_37] : memref<2x128x128xf32, #tpu.memory_space<vmem>>, vector<1x128x128xf32>
    %47 = vector.shape_cast %46 : vector<1x128x128xf32> to vector<128x128xf32>
    %c0_38 = arith.constant 0 : index
    %c0_39 = arith.constant 0 : index
    %c0_40 = arith.constant 0 : index
    %48 = vector.load %arg12[%c0_38, %c0_39, %c0_40] : memref<2x1x128xf32, #tpu.memory_space<vmem>>, vector<1x1x128xf32>
    %49 = vector.shape_cast %48 : vector<1x1x128xf32> to vector<1x128xf32>
    %cst_41 = arith.constant dense<0.000000e+00> : vector<8x128xf32>
    %50 = tpu.matmul %45, %47, %cst_41 {dimension_numbers = #tpu.dot_dimension_numbers<[1], [0], [0], [1], [0, 0, 1, 1], [], []>} : vector<8x128xf32>, vector<128x128xf32>, vector<8x128xf32> -> vector<8x128xf32>
    %51 = vector.broadcast %49 : vector<1x128xf32> to vector<8x128xf32>
    %52 = arith.addf %50, %51 : vector<8x128xf32>
    %cst_42 = arith.constant 0.000000e+00 : f32
    %53 = vector.broadcast %cst_42 : f32 to vector<8x128xf32>
    %54 = arith.maximumf %52, %53 : vector<8x128xf32>
    %c1_43 = arith.constant 1 : index
    %c0_44 = arith.constant 0 : index
    %c0_45 = arith.constant 0 : index
    %55 = vector.load %arg11[%c1_43, %c0_44, %c0_45] : memref<2x128x128xf32, #tpu.memory_space<vmem>>, vector<1x128x128xf32>
    %56 = vector.shape_cast %55 : vector<1x128x128xf32> to vector<128x128xf32>
    %c1_46 = arith.constant 1 : index
    %c0_47 = arith.constant 0 : index
    %c0_48 = arith.constant 0 : index
    %57 = vector.load %arg12[%c1_46, %c0_47, %c0_48] : memref<2x1x128xf32, #tpu.memory_space<vmem>>, vector<1x1x128xf32>
    %58 = vector.shape_cast %57 : vector<1x1x128xf32> to vector<1x128xf32>
    %cst_49 = arith.constant dense<0.000000e+00> : vector<8x128xf32>
    %59 = tpu.matmul %54, %56, %cst_49 {dimension_numbers = #tpu.dot_dimension_numbers<[1], [0], [0], [1], [0, 0, 1, 1], [], []>} : vector<8x128xf32>, vector<128x128xf32>, vector<8x128xf32> -> vector<8x128xf32>
    %60 = vector.broadcast %58 : vector<1x128xf32> to vector<8x128xf32>
    %61 = arith.addf %59, %60 : vector<8x128xf32>
    %cst_50 = arith.constant 0.000000e+00 : f32
    %62 = vector.broadcast %cst_50 : f32 to vector<8x128xf32>
    %63 = arith.maximumf %61, %62 : vector<8x128xf32>
    %c0_51 = arith.constant 0 : index
    %c0_52 = arith.constant 0 : index
    %64 = vector.load %arg13[%c0_51, %c0_52] : memref<128x128xf32, #tpu.memory_space<vmem>>, vector<128x128xf32>
    %c0_53 = arith.constant 0 : index
    %c0_54 = arith.constant 0 : index
    %65 = vector.load %arg14[%c0_53, %c0_54] : memref<1x128xf32, #tpu.memory_space<vmem>>, vector<1x128xf32>
    %cst_55 = arith.constant dense<0.000000e+00> : vector<8x128xf32>
    %66 = tpu.matmul %63, %64, %cst_55 {dimension_numbers = #tpu.dot_dimension_numbers<[1], [0], [0], [1], [0, 0, 1, 1], [], []>} : vector<8x128xf32>, vector<128x128xf32>, vector<8x128xf32> -> vector<8x128xf32>
    %67 = vector.broadcast %65 : vector<1x128xf32> to vector<8x128xf32>
    %68 = arith.addf %66, %67 : vector<8x128xf32>
    %69 = arith.negf %68 : vector<8x128xf32>
    %70 = math.exp %69 : vector<8x128xf32>
    %cst_56 = arith.constant 1.000000e+00 : f32
    %71 = vector.broadcast %cst_56 : f32 to vector<8x128xf32>
    %72 = arith.addf %71, %70 : vector<8x128xf32>
    %73 = arith.divf %71, %72 : vector<8x128xf32>
    %c0_57 = arith.constant 0 : index
    %c0_58 = arith.constant 0 : index
    %74 = vector.load %arg15[%c0_57, %c0_58] : memref<8x128xf32, #tpu.memory_space<vmem>>, vector<8x128xf32>
    tpu.vector_store %arg15[%c0_57, %c0_58], %73 {strides = array<i32>} : memref<8x128xf32, #tpu.memory_space<vmem>>, vector<8x128xf32>,
    %75 = tpu.concatenate %30, %38 in 1 : vector<8x256xf32>, vector<8x128xf32> -> vector<8x384xf32>
    %c0_59 = arith.constant 0 : index
    %c0_60 = arith.constant 0 : index
    %76 = vector.load %arg16[%c0_59, %c0_60] : memref<8x384xf32, #tpu.memory_space<vmem>>, vector<8x384xf32>
    tpu.vector_store %arg16[%c0_59, %c0_60], %75 {strides = array<i32>} : memref<8x384xf32, #tpu.memory_space<vmem>>, vector<8x384xf32>,
    return
  }
  func.func @transform_0(%arg0: i32) -> (i32, i32) {
    %c0_i32 = arith.constant 0 : i32
    %c0_i32_0 = arith.constant 0 : i32
    return %arg0, %c0_i32 : i32, i32
  }
  func.func @transform_1(%arg0: i32) -> (i32, i32) {
    %c0_i32 = arith.constant 0 : i32
    %c0_i32_0 = arith.constant 0 : i32
    return %arg0, %c0_i32 : i32, i32
  }
  func.func @transform_2(%arg0: i32) -> (i32, i32) {
    %c0_i32 = arith.constant 0 : i32
    %c0_i32_0 = arith.constant 0 : i32
    %c0_i32_1 = arith.constant 0 : i32
    return %c0_i32, %c0_i32_0 : i32, i32
  }
  func.func @transform_3(%arg0: i32) -> (i32, i32) {
    %c0_i32 = arith.constant 0 : i32
    %c0_i32_0 = arith.constant 0 : i32
    %c0_i32_1 = arith.constant 0 : i32
    return %c0_i32, %c0_i32_0 : i32, i32
  }
  func.func @transform_4(%arg0: i32) -> (i32, i32, i32) {
    %c0_i32 = arith.constant 0 : i32
    %c0_i32_0 = arith.constant 0 : i32
    %c0_i32_1 = arith.constant 0 : i32
    %c0_i32_2 = arith.constant 0 : i32
    return %c0_i32, %c0_i32_0, %c0_i32_1 : i32, i32, i32
  }
  func.func @transform_5(%arg0: i32) -> (i32, i32, i32) {
    %c0_i32 = arith.constant 0 : i32
    %c0_i32_0 = arith.constant 0 : i32
    %c0_i32_1 = arith.constant 0 : i32
    %c0_i32_2 = arith.constant 0 : i32
    return %c0_i32, %c0_i32_0, %c0_i32_1 : i32, i32, i32
  }
  func.func @transform_6(%arg0: i32) -> (i32, i32) {
    %c0_i32 = arith.constant 0 : i32
    %c0_i32_0 = arith.constant 0 : i32
    %c0_i32_1 = arith.constant 0 : i32
    return %c0_i32, %c0_i32_0 : i32, i32
  }
  func.func @transform_7(%arg0: i32) -> (i32, i32) {
    %c0_i32 = arith.constant 0 : i32
    %c0_i32_0 = arith.constant 0 : i32
    %c0_i32_1 = arith.constant 0 : i32
    return %c0_i32, %c0_i32_0 : i32, i32
  }
  func.func @transform_8(%arg0: i32) -> (i32, i32) {
    %c0_i32 = arith.constant 0 : i32
    %c0_i32_0 = arith.constant 0 : i32
    %c0_i32_1 = arith.constant 0 : i32
    return %c0_i32, %c0_i32_0 : i32, i32
  }
  func.func @transform_9(%arg0: i32) -> (i32, i32) {
    %c0_i32 = arith.constant 0 : i32
    %c0_i32_0 = arith.constant 0 : i32
    %c0_i32_1 = arith.constant 0 : i32
    return %c0_i32, %c0_i32_0 : i32, i32
  }
  func.func @transform_10(%arg0: i32) -> (i32, i32, i32) {
    %c0_i32 = arith.constant 0 : i32
    %c0_i32_0 = arith.constant 0 : i32
    %c0_i32_1 = arith.constant 0 : i32
    %c0_i32_2 = arith.constant 0 : i32
    return %c0_i32, %c0_i32_0, %c0_i32_1 : i32, i32, i32
  }
  func.func @transform_11(%arg0: i32) -> (i32, i32, i32) {
    %c0_i32 = arith.constant 0 : i32
    %c0_i32_0 = arith.constant 0 : i32
    %c0_i32_1 = arith.constant 0 : i32
    %c0_i32_2 = arith.constant 0 : i32
    return %c0_i32, %c0_i32_0, %c0_i32_1 : i32, i32, i32
  }
  func.func @transform_12(%arg0: i32) -> (i32, i32) {
    %c0_i32 = arith.constant 0 : i32
    %c0_i32_0 = arith.constant 0 : i32
    %c0_i32_1 = arith.constant 0 : i32
    return %c0_i32, %c0_i32_0 : i32, i32
  }
  func.func @transform_13(%arg0: i32) -> (i32, i32) {
    %c0_i32 = arith.constant 0 : i32
    %c0_i32_0 = arith.constant 0 : i32
    %c0_i32_1 = arith.constant 0 : i32
    return %c0_i32, %c0_i32_0 : i32, i32
  }
  func.func @transform_14(%arg0: i32) -> (i32, i32) {
    %c0_i32 = arith.constant 0 : i32
    %c0_i32_0 = arith.constant 0 : i32
    return %arg0, %c0_i32 : i32, i32
  }
  func.func @transform_15(%arg0: i32) -> (i32, i32) {
    %c0_i32 = arith.constant 0 : i32
    %c0_i32_0 = arith.constant 0 : i32
    return %arg0, %c0_i32 : i32, i32
  }
}

module attributes {stable_mosaic.version = 11 : i64} {
  func.func @_vae_forward_kernel(%arg0: i32, %arg1: memref<8x128xf32, #tpu.memory_space<vmem>>, %arg2: memref<8x128xf32, #tpu.memory_space<vmem>>, %arg3: memref<128x128xf32, #tpu.memory_space<vmem>>, %arg4: memref<1x128xf32, #tpu.memory_space<vmem>>, %arg5: memref<2x128x128xf32, #tpu.memory_space<vmem>>, %arg6: memref<2x1x128xf32, #tpu.memory_space<vmem>>, %arg7: memref<128x256xf32, #tpu.memory_space<vmem>>, %arg8: memref<1x256xf32, #tpu.memory_space<vmem>>, %arg9: memref<128x128xf32, #tpu.memory_space<vmem>>, %arg10: memref<1x128xf32, #tpu.memory_space<vmem>>, %arg11: memref<2x128x128xf32, #tpu.memory_space<vmem>>, %arg12: memref<2x1x128xf32, #tpu.memory_space<vmem>>, %arg13: memref<128x128xf32, #tpu.memory_space<vmem>>, %arg14: memref<1x128xf32, #tpu.memory_space<vmem>>, %arg15: memref<8x128xf32, #tpu.memory_space<vmem>>, %arg16: memref<8x384xf32, #tpu.memory_space<vmem>>) attributes {dimension_semantics = [#tpu.dimension_semantics<parallel>], iteration_bounds = array<i64: 1>, scalar_prefetch = 0 : i64, scratch_operands = 0 : i64, tpu.core_type = #tpu.core_type<tc>, window_params = [{transform_indices = @transform_0, window_bounds = array<i64: 8, 128>}, {transform_indices = @transform_1, window_bounds = array<i64: 8, 128>}, {pipeline_mode = #tpu.pipeline_mode<synchronous>, transform_indices = @transform_2, window_bounds = array<i64: 128, 128>}, {pipeline_mode = #tpu.pipeline_mode<synchronous>, transform_indices = @transform_3, window_bounds = array<i64: 1, 128>}, {pipeline_mode = #tpu.pipeline_mode<synchronous>, transform_indices = @transform_4, window_bounds = array<i64: 2, 128, 128>}, {pipeline_mode = #tpu.pipeline_mode<synchronous>, transform_indices = @transform_5, window_bounds = array<i64: 2, 1, 128>}, {pipeline_mode = #tpu.pipeline_mode<synchronous>, transform_indices = @transform_6, window_bounds = array<i64: 128, 256>}, {pipeline_mode = #tpu.pipeline_mode<synchronous>, transform_indices = @transform_7, window_bounds = array<i64: 1, 256>}, {pipeline_mode = #tpu.pipeline_mode<synchronous>, transform_indices = @transform_8, window_bounds = array<i64: 128, 128>}, {pipeline_mode = #tpu.pipeline_mode<synchronous>, transform_indices = @transform_9, window_bounds = array<i64: 1, 128>}, {pipeline_mode = #tpu.pipeline_mode<synchronous>, transform_indices = @transform_10, window_bounds = array<i64: 2, 128, 128>}, {pipeline_mode = #tpu.pipeline_mode<synchronous>, transform_indices = @transform_11, window_bounds = array<i64: 2, 1, 128>}, {pipeline_mode = #tpu.pipeline_mode<synchronous>, transform_indices = @transform_12, window_bounds = array<i64: 128, 128>}, {pipeline_mode = #tpu.pipeline_mode<synchronous>, transform_indices = @transform_13, window_bounds = array<i64: 1, 128>}, {transform_indices = @transform_14, window_bounds = array<i64: 8, 128>}, {transform_indices = @transform_15, window_bounds = array<i64: 8, 384>}]} {
    %c0 = arith.constant 0 : index
    %c0_0 = arith.constant 0 : index
    %0 = vector.load %arg1[%c0, %c0_0] : memref<8x128xf32, #tpu.memory_space<vmem>>, vector<8x128xf32>
    %c0_1 = arith.constant 0 : index
    %c0_2 = arith.constant 0 : index
    %1 = vector.load %arg3[%c0_1, %c0_2] : memref<128x128xf32, #tpu.memory_space<vmem>>, vector<128x128xf32>
    %c0_3 = arith.constant 0 : index
    %c0_4 = arith.constant 0 : index
    %2 = vector.load %arg4[%c0_3, %c0_4] : memref<1x128xf32, #tpu.memory_space<vmem>>, vector<1x128xf32>
    %cst = arith.constant dense<0.000000e+00> : vector<8x128xf32>
    %3 = tpu.matmul %0, %1, %cst {dimension_numbers = #tpu.dot_dimension_numbers<[1], [0], [0], [1], [0, 0, 1, 1], [], []>} : vector<8x128xf32>, vector<128x128xf32>, vector<8x128xf32> -> vector<8x128xf32>
    %4 = vector.broadcast %2 : vector<1x128xf32> to vector<8x128xf32>
    %5 = arith.addf %3, %4 : vector<8x128xf32>
    %cst_5 = arith.constant 0.000000e+00 : f32
    %6 = vector.broadcast %cst_5 : f32 to vector<8x128xf32>
    %7 = arith.maximumf %5, %6 : vector<8x128xf32>
    %c0_6 = arith.constant 0 : index
    %c0_7 = arith.constant 0 : index
    %c0_8 = arith.constant 0 : index
    %8 = vector.load %arg5[%c0_6, %c0_7, %c0_8] : memref<2x128x128xf32, #tpu.memory_space<vmem>>, vector<1x128x128xf32>
    %9 = vector.shape_cast %8 : vector<1x128x128xf32> to vector<128x128xf32>
    %c0_9 = arith.constant 0 : index
    %c0_10 = arith.constant 0 : index
    %c0_11 = arith.constant 0 : index
    %10 = vector.load %arg6[%c0_9, %c0_10, %c0_11] : memref<2x1x128xf32, #tpu.memory_space<vmem>>, vector<1x1x128xf32>
    %11 = vector.shape_cast %10 : vector<1x1x128xf32> to vector<1x128xf32>
    %cst_12 = arith.constant dense<0.000000e+00> : vector<8x128xf32>
    %12 = tpu.matmul %7, %9, %cst_12 {dimension_numbers = #tpu.dot_dimension_numbers<[1], [0], [0], [1], [0, 0, 1, 1], [], []>} : vector<8x128xf32>, vector<128x128xf32>, vector<8x128xf32> -> vector<8x128xf32>
    %13 = vector.broadcast %11 : vector<1x128xf32> to vector<8x128xf32>
    %14 = arith.addf %12, %13 : vector<8x128xf32>
    %cst_13 = arith.constant 0.000000e+00 : f32
    %15 = vector.broadcast %cst_13 : f32 to vector<8x128xf32>
    %16 = arith.maximumf %14, %15 : vector<8x128xf32>
    %c1 = arith.constant 1 : index
    %c0_14 = arith.constant 0 : index
    %c0_15 = arith.constant 0 : index
    %17 = vector.load %arg5[%c1, %c0_14, %c0_15] : memref<2x128x128xf32, #tpu.memory_space<vmem>>, vector<1x128x128xf32>
    %18 = vector.shape_cast %17 : vector<1x128x128xf32> to vector<128x128xf32>
    %c1_16 = arith.constant 1 : index
    %c0_17 = arith.constant 0 : index
    %c0_18 = arith.constant 0 : index
    %19 = vector.load %arg6[%c1_16, %c0_17, %c0_18] : memref<2x1x128xf32, #tpu.memory_space<vmem>>, vector<1x1x128xf32>
    %20 = vector.shape_cast %19 : vector<1x1x128xf32> to vector<1x128xf32>
    %cst_19 = arith.constant dense<0.000000e+00> : vector<8x128xf32>
    %21 = tpu.matmul %16, %18, %cst_19 {dimension_numbers = #tpu.dot_dimension_numbers<[1], [0], [0], [1], [0, 0, 1, 1], [], []>} : vector<8x128xf32>, vector<128x128xf32>, vector<8x128xf32> -> vector<8x128xf32>
    %22 = vector.broadcast %20 : vector<1x128xf32> to vector<8x128xf32>
    %23 = arith.addf %21, %22 : vector<8x128xf32>
    %cst_20 = arith.constant 0.000000e+00 : f32
    %24 = vector.broadcast %cst_20 : f32 to vector<8x128xf32>
    %25 = arith.maximumf %23, %24 : vector<8x128xf32>
    %c0_21 = arith.constant 0 : index
    %c0_22 = arith.constant 0 : index
    %26 = vector.load %arg7[%c0_21, %c0_22] : memref<128x256xf32, #tpu.memory_space<vmem>>, vector<128x256xf32>
    %c0_23 = arith.constant 0 : index
    %c0_24 = arith.constant 0 : index
    %27 = vector.load %arg8[%c0_23, %c0_24] : memref<1x256xf32, #tpu.memory_space<vmem>>, vector<1x256xf32>
    %cst_25 = arith.constant dense<0.000000e+00> : vector<8x256xf32>
    %28 = tpu.matmul %25, %26, %cst_25 {dimension_numbers = #tpu.dot_dimension_numbers<[1], [0], [0], [1], [0, 0, 1, 1], [], []>} : vector<8x128xf32>, vector<128x256xf32>, vector<8x256xf32> -> vector<8x256xf32>
    %29 = vector.broadcast %27 : vector<1x256xf32> to vector<8x256xf32>
    %30 = arith.addf %28, %29 : vector<8x256xf32>
    %31 = vector.extract_strided_slice %30 {offsets = [0, 0], sizes = [8, 128], strides = [1, 1]} : vector<8x256xf32> to vector<8x128xf32>
    %32 = vector.extract_strided_slice %30 {offsets = [0, 128], sizes = [8, 128], strides = [1, 1]} : vector<8x256xf32> to vector<8x128xf32>
    %cst_26 = arith.constant 5.000000e-01 : f32
    %33 = vector.broadcast %cst_26 : f32 to vector<8x128xf32>
    %34 = arith.mulf %32, %33 : vector<8x128xf32>
    %35 = math.exp %34 : vector<8x128xf32>
    %c0_27 = arith.constant 0 : index
    %c0_28 = arith.constant 0 : index
    %36 = vector.load %arg2[%c0_27, %c0_28] : memref<8x128xf32, #tpu.memory_space<vmem>>, vector<8x128xf32>
    %37 = arith.mulf %35, %36 : vector<8x128xf32>
    %38 = arith.addf %31, %37 : vector<8x128xf32>
    %c0_29 = arith.constant 0 : index
    %c0_30 = arith.constant 0 : index
    %39 = vector.load %arg9[%c0_29, %c0_30] : memref<128x128xf32, #tpu.memory_space<vmem>>, vector<128x128xf32>
    %c0_31 = arith.constant 0 : index
    %c0_32 = arith.constant 0 : index
    %40 = vector.load %arg10[%c0_31, %c0_32] : memref<1x128xf32, #tpu.memory_space<vmem>>, vector<1x128xf32>
    %cst_33 = arith.constant dense<0.000000e+00> : vector<8x128xf32>
    %41 = tpu.matmul %38, %39, %cst_33 {dimension_numbers = #tpu.dot_dimension_numbers<[1], [0], [0], [1], [0, 0, 1, 1], [], []>} : vector<8x128xf32>, vector<128x128xf32>, vector<8x128xf32> -> vector<8x128xf32>
    %42 = vector.broadcast %40 : vector<1x128xf32> to vector<8x128xf32>
    %43 = arith.addf %41, %42 : vector<8x128xf32>
    %cst_34 = arith.constant 0.000000e+00 : f32
    %44 = vector.broadcast %cst_34 : f32 to vector<8x128xf32>
    %45 = arith.maximumf %43, %44 : vector<8x128xf32>
    %c0_35 = arith.constant 0 : index
    %c0_36 = arith.constant 0 : index
    %c0_37 = arith.constant 0 : index
    %46 = vector.load %arg11[%c0_35, %c0_36, %c0_37] : memref<2x128x128xf32, #tpu.memory_space<vmem>>, vector<1x128x128xf32>
    %47 = vector.shape_cast %46 : vector<1x128x128xf32> to vector<128x128xf32>
    %c0_38 = arith.constant 0 : index
    %c0_39 = arith.constant 0 : index
    %c0_40 = arith.constant 0 : index
    %48 = vector.load %arg12[%c0_38, %c0_39, %c0_40] : memref<2x1x128xf32, #tpu.memory_space<vmem>>, vector<1x1x128xf32>
    %49 = vector.shape_cast %48 : vector<1x1x128xf32> to vector<1x128xf32>
    %cst_41 = arith.constant dense<0.000000e+00> : vector<8x128xf32>
    %50 = tpu.matmul %45, %47, %cst_41 {dimension_numbers = #tpu.dot_dimension_numbers<[1], [0], [0], [1], [0, 0, 1, 1], [], []>} : vector<8x128xf32>, vector<128x128xf32>, vector<8x128xf32> -> vector<8x128xf32>
    %51 = vector.broadcast %49 : vector<1x128xf32> to vector<8x128xf32>
    %52 = arith.addf %50, %51 : vector<8x128xf32>
    %cst_42 = arith.constant 0.000000e+00 : f32
    %53 = vector.broadcast %cst_42 : f32 to vector<8x128xf32>
    %54 = arith.maximumf %52, %53 : vector<8x128xf32>
    %c1_43 = arith.constant 1 : index
    %c0_44 = arith.constant 0 : index
    %c0_45 = arith.constant 0 : index
    %55 = vector.load %arg11[%c1_43, %c0_44, %c0_45] : memref<2x128x128xf32, #tpu.memory_space<vmem>>, vector<1x128x128xf32>
    %56 = vector.shape_cast %55 : vector<1x128x128xf32> to vector<128x128xf32>
    %c1_46 = arith.constant 1 : index
    %c0_47 = arith.constant 0 : index
    %c0_48 = arith.constant 0 : index
    %57 = vector.load %arg12[%c1_46, %c0_47, %c0_48] : memref<2x1x128xf32, #tpu.memory_space<vmem>>, vector<1x1x128xf32>
    %58 = vector.shape_cast %57 : vector<1x1x128xf32> to vector<1x128xf32>
    %cst_49 = arith.constant dense<0.000000e+00> : vector<8x128xf32>
    %59 = tpu.matmul %54, %56, %cst_49 {dimension_numbers = #tpu.dot_dimension_numbers<[1], [0], [0], [1], [0, 0, 1, 1], [], []>} : vector<8x128xf32>, vector<128x128xf32>, vector<8x128xf32> -> vector<8x128xf32>
    %60 = vector.broadcast %58 : vector<1x128xf32> to vector<8x128xf32>
    %61 = arith.addf %59, %60 : vector<8x128xf32>
    %cst_50 = arith.constant 0.000000e+00 : f32
    %62 = vector.broadcast %cst_50 : f32 to vector<8x128xf32>
    %63 = arith.maximumf %61, %62 : vector<8x128xf32>
    %c0_51 = arith.constant 0 : index
    %c0_52 = arith.constant 0 : index
    %64 = vector.load %arg13[%c0_51, %c0_52] : memref<128x128xf32, #tpu.memory_space<vmem>>, vector<128x128xf32>
    %c0_53 = arith.constant 0 : index
    %c0_54 = arith.constant 0 : index
    %65 = vector.load %arg14[%c0_53, %c0_54] : memref<1x128xf32, #tpu.memory_space<vmem>>, vector<1x128xf32>
    %cst_55 = arith.constant dense<0.000000e+00> : vector<8x128xf32>
    %66 = tpu.matmul %63, %64, %cst_55 {dimension_numbers = #tpu.dot_dimension_numbers<[1], [0], [0], [1], [0, 0, 1, 1], [], []>} : vector<8x128xf32>, vector<128x128xf32>, vector<8x128xf32> -> vector<8x128xf32>
    %67 = vector.broadcast %65 : vector<1x128xf32> to vector<8x128xf32>
    %68 = arith.addf %66, %67 : vector<8x128xf32>
    %69 = arith.negf %68 : vector<8x128xf32>
    %70 = math.exp %69 : vector<8x128xf32>
    %cst_56 = arith.constant 1.000000e+00 : f32
    %71 = vector.broadcast %cst_56 : f32 to vector<8x128xf32>
    %72 = arith.addf %71, %70 : vector<8x128xf32>
    %73 = arith.divf %71, %72 : vector<8x128xf32>
    %c0_57 = arith.constant 0 : index
    %c0_58 = arith.constant 0 : index
    %74 = vector.load %arg15[%c0_57, %c0_58] : memref<8x128xf32, #tpu.memory_space<vmem>>, vector<8x128xf32>
    tpu.vector_store %arg15[%c0_57, %c0_58], %73 {strides = array<i32>} : memref<8x128xf32, #tpu.memory_space<vmem>>, vector<8x128xf32>,
    %75 = tpu.concatenate %30, %38 in 1 : vector<8x256xf32>, vector<8x128xf32> -> vector<8x384xf32>
    %c0_59 = arith.constant 0 : index
    %c0_60 = arith.constant 0 : index
    %76 = vector.load %arg16[%c0_59, %c0_60] : memref<8x384xf32, #tpu.memory_space<vmem>>, vector<8x384xf32>
    tpu.vector_store %arg16[%c0_59, %c0_60], %75 {strides = array<i32>} : memref<8x384xf32, #tpu.memory_space<vmem>>, vector<8x384xf32>,
    return
  }
  func.func @transform_0(%arg0: i32) -> (i32, i32) {
    %c0_i32 = arith.constant 0 : i32
    %c0_i32_0 = arith.constant 0 : i32
    return %arg0, %c0_i32 : i32, i32
  }
  func.func @transform_1(%arg0: i32) -> (i32, i32) {
    %c0_i32 = arith.constant 0 : i32
    %c0_i32_0 = arith.constant 0 : i32
    return %arg0, %c0_i32 : i32, i32
  }
  func.func @transform_2(%arg0: i32) -> (i32, i32) {
    %c0_i32 = arith.constant 0 : i32
    %c0_i32_0 = arith.constant 0 : i32
    %c0_i32_1 = arith.constant 0 : i32
    return %c0_i32, %c0_i32_0 : i32, i32
  }
  func.func @transform_3(%arg0: i32) -> (i32, i32) {
    %c0_i32 = arith.constant 0 : i32
    %c0_i32_0 = arith.constant 0 : i32
    %c0_i32_1 = arith.constant 0 : i32
    return %c0_i32, %c0_i32_0 : i32, i32
  }
  func.func @transform_4(%arg0: i32) -> (i32, i32, i32) {
    %c0_i32 = arith.constant 0 : i32
    %c0_i32_0 = arith.constant 0 : i32
    %c0_i32_1 = arith.constant 0 : i32
    %c0_i32_2 = arith.constant 0 : i32
    return %c0_i32, %c0_i32_0, %c0_i32_1 : i32, i32, i32
  }
  func.func @transform_5(%arg0: i32) -> (i32, i32, i32) {
    %c0_i32 = arith.constant 0 : i32
    %c0_i32_0 = arith.constant 0 : i32
    %c0_i32_1 = arith.constant 0 : i32
    %c0_i32_2 = arith.constant 0 : i32
    return %c0_i32, %c0_i32_0, %c0_i32_1 : i32, i32, i32
  }
  func.func @transform_6(%arg0: i32) -> (i32, i32) {
    %c0_i32 = arith.constant 0 : i32
    %c0_i32_0 = arith.constant 0 : i32
    %c0_i32_1 = arith.constant 0 : i32
    return %c0_i32, %c0_i32_0 : i32, i32
  }
  func.func @transform_7(%arg0: i32) -> (i32, i32) {
    %c0_i32 = arith.constant 0 : i32
    %c0_i32_0 = arith.constant 0 : i32
    %c0_i32_1 = arith.constant 0 : i32
    return %c0_i32, %c0_i32_0 : i32, i32
  }
  func.func @transform_8(%arg0: i32) -> (i32, i32) {
    %c0_i32 = arith.constant 0 : i32
    %c0_i32_0 = arith.constant 0 : i32
    %c0_i32_1 = arith.constant 0 : i32
    return %c0_i32, %c0_i32_0 : i32, i32
  }
  func.func @transform_9(%arg0: i32) -> (i32, i32) {
    %c0_i32 = arith.constant 0 : i32
    %c0_i32_0 = arith.constant 0 : i32
    %c0_i32_1 = arith.constant 0 : i32
    return %c0_i32, %c0_i32_0 : i32, i32
  }
  func.func @transform_10(%arg0: i32) -> (i32, i32, i32) {
    %c0_i32 = arith.constant 0 : i32
    %c0_i32_0 = arith.constant 0 : i32
    %c0_i32_1 = arith.constant 0 : i32
    %c0_i32_2 = arith.constant 0 : i32
    return %c0_i32, %c0_i32_0, %c0_i32_1 : i32, i32, i32
  }
  func.func @transform_11(%arg0: i32) -> (i32, i32, i32) {
    %c0_i32 = arith.constant 0 : i32
    %c0_i32_0 = arith.constant 0 : i32
    %c0_i32_1 = arith.constant 0 : i32
    %c0_i32_2 = arith.constant 0 : i32
    return %c0_i32, %c0_i32_0, %c0_i32_1 : i32, i32, i32
  }
  func.func @transform_12(%arg0: i32) -> (i32, i32) {
    %c0_i32 = arith.constant 0 : i32
    %c0_i32_0 = arith.constant 0 : i32
    %c0_i32_1 = arith.constant 0 : i32
    return %c0_i32, %c0_i32_0 : i32, i32
  }
  func.func @transform_13(%arg0: i32) -> (i32, i32) {
    %c0_i32 = arith.constant 0 : i32
    %c0_i32_0 = arith.constant 0 : i32
    %c0_i32_1 = arith.constant 0 : i32
    return %c0_i32, %c0_i32_0 : i32, i32
  }
  func.func @transform_14(%arg0: i32) -> (i32, i32) {
    %c0_i32 = arith.constant 0 : i32
    %c0_i32_0 = arith.constant 0 : i32
    return %arg0, %c0_i32 : i32, i32
  }
  func.func @transform_15(%arg0: i32) -> (i32, i32) {
    %c0_i32 = arith.constant 0 : i32
    %c0_i32_0 = arith.constant 0 : i32
    return %arg0, %c0_i32 : i32, i32
  }
}

</mosaic_0001>

<llo_original>
// kernel: tpu_custom_call.1
$region0: #{tpu_custom_call.1}
  #allocation0 [shape = 'u32[]', space=smem, size = 0x4, offset = 0x4, fixed_abs, tag = 'smem constant byte address 0x4 - core index']
  #allocation1 [shape = 'u32[72,128]{1,0:T(1,128)}', space=vmem, size = 0x9000, scoped, tag = 'internal scratch']
  %s0 = inlined_call_operand.hbm [shape: f32[8,128], index: 0, kind: input, shape index: {}]
  %s1 = inlined_call_operand.hbm [shape: f32[8,128], index: 1, kind: input, shape index: {}]
  %s2 = inlined_call_operand.hbm [shape: f32[128,128], index: 2, kind: input, shape index: {}]
  %s3 = inlined_call_operand.hbm [shape: f32[1,128], index: 3, kind: input, shape index: {}]
  %s4 = inlined_call_operand.hbm [shape: f32[2,128,128], index: 4, kind: input, shape index: {}]
  %s5 = inlined_call_operand.vmem [shape: f32[2,1,128], index: 5, kind: input, shape index: {}]
  %s6 = inlined_call_operand.hbm [shape: f32[128,256], index: 6, kind: input, shape index: {}]
  %s7 = inlined_call_operand.vmem [shape: f32[1,256], index: 7, kind: input, shape index: {}]
  %s8 = inlined_call_operand.hbm [shape: f32[128,128], index: 8, kind: input, shape index: {}]
  %s9 = inlined_call_operand.vmem [shape: f32[1,128], index: 9, kind: input, shape index: {}]
  %s10 = inlined_call_operand.hbm [shape: f32[2,128,128], index: 10, kind: input, shape index: {}]
  %s11 = inlined_call_operand.vmem [shape: f32[2,1,128], index: 11, kind: input, shape index: {}]
  %s12 = inlined_call_operand.hbm [shape: f32[128,128], index: 12, kind: input, shape index: {}]
  %s13 = inlined_call_operand.vmem [shape: f32[1,128], index: 13, kind: input, shape index: {}]
  %s14 = inlined_call_operand.hbm [shape: f32[8,128], index: 14, kind: output, shape index: {0}]
  %s15 = inlined_call_operand.hbm [shape: f32[8,384], index: 15, kind: output, shape index: {1}]
  %16 = xla_tuple %s14, %s15
  %s17 = sld [smem:[#allocation0]]
  $region110: #{tpu_custom_call.1} parent=0
    _
  %s19 = ssub.s32 1, %s17
  %s20 = scalar_select 0, %s19, %s17
  $region1: #{tpu_custom_call.1} parent=0
    #allocation2 [shape = 'u8[4096]{0}', space=vmem, size = 0x1000, scoped, tag = 'input window, operand 0, single buffered']
    #allocation3 [shape = 's32[1]{0}', space=sflag, size = 0x4, scoped, tag = 'scoped memory for tpu_custom_call.1']
    #allocation4 [shape = 's32[1]{0}', space=sflag, size = 0x4, scoped, tag = 'scoped memory for tpu_custom_call.1']
    #allocation5 [shape = 'u8[4096]{0}', space=vmem, size = 0x1000, scoped, tag = 'input window, operand 1, single buffered']
    #allocation6 [shape = 's32[1]{0}', space=sflag, size = 0x4, scoped, tag = 'scoped memory for tpu_custom_call.1']
    #allocation7 [shape = 'u8[65536]{0}', space=vmem, size = 0x10000, scoped, tag = 'input window, operand 2, single buffered']
    #allocation8 [shape = 'u8[512]{0}', space=vmem, size = 0x400, scoped, tag = 'input window, operand 3, single buffered']
    #allocation9 [shape = 's32[1]{0}', space=sflag, size = 0x4, scoped, tag = 'scoped memory for tpu_custom_call.1']
    #allocation10 [shape = 'u8[131072]{0}', space=vmem, size = 0x20000, scoped, tag = 'input window, operand 4, single buffered']
    #allocation11 [shape = 'u8[131072]{0}', space=vmem, size = 0x20000, scoped, tag = 'input window, operand 6, single buffered']
    #allocation12 [shape = 's32[1]{0}', space=sflag, size = 0x4, scoped, tag = 'scoped memory for tpu_custom_call.1']
    #allocation13 [shape = 'u8[65536]{0}', space=vmem, size = 0x10000, scoped, tag = 'input window, operand 8, single buffered']
    #allocation14 [shape = 'u8[131072]{0}', space=vmem, size = 0x20000, scoped, tag = 'input window, operand 10, single buffered']
    #allocation15 [shape = 's32[1]{0}', space=sflag, size = 0x4, scoped, tag = 'scoped memory for tpu_custom_call.1']
    #allocation16 [shape = 'u8[65536]{0}', space=vmem, size = 0x10000, scoped, tag = 'input window, operand 12, single buffered']
    #allocation17 [shape = 'u8[4096]{0}', space=vmem, size = 0x1000, scoped, tag = 'output window, operand 0, single buffered']
    #allocation18 [shape = 'u8[12288]{0}', space=vmem, size = 0x3000, scoped, tag = 'output window, operand 1, single buffered']
    #allocation19 [shape = 's32[1]{0}', space=sflag, size = 0x4, scoped, tag = 'scoped memory for tpu_custom_call.1']
    %21 = vsyncpa [#allocation3], 0
    %22 = vsyncpa [#allocation6], 0
    %23 = vsyncpa [#allocation9], 0
    %24 = vsyncpa [#allocation12], 0
    %25 = vsyncpa [#allocation15], 0
    %26 = vsyncpa [#allocation4], 0
    %27 = vsyncpa [#allocation19], 0
    // Predicated region
    $region2: #{tpu_custom_call.1} parent=1 // pred_check
      _
    $region3: #{tpu_custom_call.1} parent=1 // pred_check_branch
      %29 = sbr.rel (0) target = $region5
    $region4: #{tpu_custom_call.1} parent=1 // pred_region
      %31 = vsyncadd [#allocation3], 0
      %s33 = sshll.u32 %s0, 4
      %s34 = int_to_ptr.hbm [resolvable:$true] %s33
      %s35 = sshll.u32 [#allocation2], 4
      %s36 = int_to_ptr.vmem [resolvable:$true] %s35
      %38 = dma.hbm_to_vmem [thread:$0]  %s34, 128, %s36, [#allocation3]
    $region5: #{tpu_custom_call.1} parent=1 // pred_fallthru
      _
    // Predicated region
    $region6: #{tpu_custom_call.1} parent=1 // pred_check
      _
    $region7: #{tpu_custom_call.1} parent=1 // pred_check_branch
      %40 = sbr.rel (0) target = $region9
    $region8: #{tpu_custom_call.1} parent=1 // pred_region
      %42 = vsyncadd [#allocation6], 0
      %s44 = sshll.u32 %s1, 4
      %s45 = int_to_ptr.hbm [resolvable:$true] %s44
      %s46 = sshll.u32 [#allocation5], 4
      %s47 = int_to_ptr.vmem [resolvable:$true] %s46
      %49 = dma.hbm_to_vmem [thread:$0]  %s45, 128, %s47, [#allocation6]
    $region9: #{tpu_custom_call.1} parent=1 // pred_fallthru
      _
    // Predicated region
    $region10: #{tpu_custom_call.1} parent=1 // pred_check
      _
    $region11: #{tpu_custom_call.1} parent=1 // pred_check_branch
      %51 = sbr.rel (0) target = $region13
    $region12: #{tpu_custom_call.1} parent=1 // pred_region
      %53 = vsyncadd [#allocation6], 0
      %s54 = sshll.u32 %s2, 4
      %s55 = int_to_ptr.hbm [resolvable:$true] %s54
      %s56 = sshll.u32 [#allocation7], 4
      %s57 = int_to_ptr.vmem [resolvable:$true] %s56
      %62 = dma.hbm_to_vmem [thread:$0]  %s55, 2048, %s57, [#allocation6], 128, 128, 8
    $region13: #{tpu_custom_call.1} parent=1 // pred_fallthru
      _
    // Predicated region
    $region14: #{tpu_custom_call.1} parent=1 // pred_check
      _
    $region15: #{tpu_custom_call.1} parent=1 // pred_check_branch
      %64 = sbr.rel (0) target = $region17
    $region16: #{tpu_custom_call.1} parent=1 // pred_region
      %66 = vsyncadd [#allocation9], 0
      %s68 = sshll.u32 %s3, 4
      %s69 = int_to_ptr.hbm [resolvable:$true] %s68
      %s70 = sshll.u32 [#allocation8], 4
      %s71 = int_to_ptr.vmem [resolvable:$true] %s70
      %73 = dma.hbm_to_vmem [thread:$0]  %s69, 16, %s71, [#allocation9]
    $region17: #{tpu_custom_call.1} parent=1 // pred_fallthru
      _
    // Predicated region
    $region18: #{tpu_custom_call.1} parent=1 // pred_check
      _
    $region19: #{tpu_custom_call.1} parent=1 // pred_check_branch
      %75 = sbr.rel (0) target = $region21
    $region20: #{tpu_custom_call.1} parent=1 // pred_region
      %77 = vsyncadd [#allocation9], 0
      %s78 = sshll.u32 %s4, 4
      %s79 = int_to_ptr.hbm [resolvable:$true] %s78
      %s80 = sshll.u32 [#allocation10], 4
      %s81 = int_to_ptr.vmem [resolvable:$true] %s80
      %86 = dma.hbm_to_vmem [thread:$0]  %s79, 4096, %s81, [#allocation9], 128, 128, 8
    $region21: #{tpu_custom_call.1} parent=1 // pred_fallthru
      _
    // Predicated region
    $region22: #{tpu_custom_call.1} parent=1 // pred_check
      _
    $region23: #{tpu_custom_call.1} parent=1 // pred_check_branch
      %88 = sbr.rel (0) target = $region25
    $region24: #{tpu_custom_call.1} parent=1 // pred_region
      _
    $region25: #{tpu_custom_call.1} parent=1 // pred_fallthru
      _
    // Predicated region
    $region26: #{tpu_custom_call.1} parent=1 // pred_check
      _
    $region27: #{tpu_custom_call.1} parent=1 // pred_check_branch
      %90 = sbr.rel (0) target = $region29
    $region28: #{tpu_custom_call.1} parent=1 // pred_region
      %92 = vsyncadd [#allocation12], 0
      %s93 = sshll.u32 %s6, 4
      %s94 = int_to_ptr.hbm [resolvable:$true] %s93
      %s95 = sshll.u32 [#allocation11], 4
      %s96 = int_to_ptr.vmem [resolvable:$true] %s95
      %101 = dma.hbm_to_vmem [thread:$0]  %s94, 4096, %s96, [#allocation12], 256, 256, 16
    $region29: #{tpu_custom_call.1} parent=1 // pred_fallthru
      _
    // Predicated region
    $region30: #{tpu_custom_call.1} parent=1 // pred_check
      _
    $region31: #{tpu_custom_call.1} parent=1 // pred_check_branch
      %103 = sbr.rel (0) target = $region33
    $region32: #{tpu_custom_call.1} parent=1 // pred_region
      _
    $region33: #{tpu_custom_call.1} parent=1 // pred_fallthru
      _
    // Predicated region
    $region34: #{tpu_custom_call.1} parent=1 // pred_check
      _
    $region35: #{tpu_custom_call.1} parent=1 // pred_check_branch
      %105 = sbr.rel (0) target = $region37
    $region36: #{tpu_custom_call.1} parent=1 // pred_region
      %107 = vsyncadd [#allocation12], 0
      %s108 = sshll.u32 %s8, 4
      %s109 = int_to_ptr.hbm [resolvable:$true] %s108
      %s110 = sshll.u32 [#allocation13], 4
      %s111 = int_to_ptr.vmem [resolvable:$true] %s110
      %116 = dma.hbm_to_vmem [thread:$0]  %s109, 2048, %s111, [#allocation12], 128, 128, 8
    $region37: #{tpu_custom_call.1} parent=1 // pred_fallthru
      _
    // Predicated region
    $region38: #{tpu_custom_call.1} parent=1 // pred_check
      _
    $region39: #{tpu_custom_call.1} parent=1 // pred_check_branch
      %118 = sbr.rel (0) target = $region41
    $region40: #{tpu_custom_call.1} parent=1 // pred_region
      _
    $region41: #{tpu_custom_call.1} parent=1 // pred_fallthru
      _
    // Predicated region
    $region42: #{tpu_custom_call.1} parent=1 // pred_check
      _
    $region43: #{tpu_custom_call.1} parent=1 // pred_check_branch
      %120 = sbr.rel (0) target = $region45
    $region44: #{tpu_custom_call.1} parent=1 // pred_region
      %122 = vsyncadd [#allocation15], 0
      %s123 = sshll.u32 %s10, 4
      %s124 = int_to_ptr.hbm [resolvable:$true] %s123
      %s125 = sshll.u32 [#allocation14], 4
      %s126 = int_to_ptr.vmem [resolvable:$true] %s125
      %131 = dma.hbm_to_vmem [thread:$0]  %s124, 4096, %s126, [#allocation15], 128, 128, 8
    $region45: #{tpu_custom_call.1} parent=1 // pred_fallthru
      _
    // Predicated region
    $region46: #{tpu_custom_call.1} parent=1 // pred_check
      _
    $region47: #{tpu_custom_call.1} parent=1 // pred_check_branch
      %133 = sbr.rel (0) target = $region49
    $region48: #{tpu_custom_call.1} parent=1 // pred_region
      _
    $region49: #{tpu_custom_call.1} parent=1 // pred_fallthru
      _
    // Predicated region
    $region50: #{tpu_custom_call.1} parent=1 // pred_check
      _
    $region51: #{tpu_custom_call.1} parent=1 // pred_check_branch
      %135 = sbr.rel (0) target = $region53
    $region52: #{tpu_custom_call.1} parent=1 // pred_region
      %137 = vsyncadd [#allocation15], 0
      %s138 = sshll.u32 %s12, 4
      %s139 = int_to_ptr.hbm [resolvable:$true] %s138
      %s140 = sshll.u32 [#allocation16], 4
      %s141 = int_to_ptr.vmem [resolvable:$true] %s140
      %146 = dma.hbm_to_vmem [thread:$0]  %s139, 2048, %s141, [#allocation15], 128, 128, 8
    $region53: #{tpu_custom_call.1} parent=1 // pred_fallthru
      _
    // Predicated region
    $region54: #{tpu_custom_call.1} parent=1 // pred_check
      _
    $region55: #{tpu_custom_call.1} parent=1 // pred_check_branch
      %148 = sbr.rel (0) target = $region57
    $region56: #{tpu_custom_call.1} parent=1 // pred_region
      _
    $region57: #{tpu_custom_call.1} parent=1 // pred_fallthru
      _
    // Predicated region
    $region58: #{tpu_custom_call.1} parent=1 // pred_check
      _
    $region59: #{tpu_custom_call.1} parent=1 // pred_check_branch
      %150 = sbr.rel (0) target = $region61
    $region60: #{tpu_custom_call.1} parent=1 // pred_region
      %152 = dma.done [#allocation3], 128
    $region61: #{tpu_custom_call.1} parent=1 // pred_fallthru
      _
    // Predicated region
    $region62: #{tpu_custom_call.1} parent=1 // pred_check
      _
    $region63: #{tpu_custom_call.1} parent=1 // pred_check_branch
      %154 = sbr.rel (0) target = $region65
    $region64: #{tpu_custom_call.1} parent=1 // pred_region
      %156 = dma.done [#allocation6], 128
    $region65: #{tpu_custom_call.1} parent=1 // pred_fallthru
      _
    // Predicated region
    $region66: #{tpu_custom_call.1} parent=1 // pred_check
      _
    $region67: #{tpu_custom_call.1} parent=1 // pred_check_branch
      %158 = sbr.rel (0) target = $region69
    $region68: #{tpu_custom_call.1} parent=1 // pred_region
      %160 = dma.done [#allocation6], 2048
    $region69: #{tpu_custom_call.1} parent=1 // pred_fallthru
      _
    // Predicated region
    $region70: #{tpu_custom_call.1} parent=1 // pred_check
      _
    $region71: #{tpu_custom_call.1} parent=1 // pred_check_branch
      %162 = sbr.rel (0) target = $region73
    $region72: #{tpu_custom_call.1} parent=1 // pred_region
      %164 = dma.done [#allocation9], 16
    $region73: #{tpu_custom_call.1} parent=1 // pred_fallthru
      _
    // Predicated region
    $region74: #{tpu_custom_call.1} parent=1 // pred_check
      _
    $region75: #{tpu_custom_call.1} parent=1 // pred_check_branch
      %166 = sbr.rel (0) target = $region77
    $region76: #{tpu_custom_call.1} parent=1 // pred_region
      %168 = dma.done [#allocation9], 4096
    $region77: #{tpu_custom_call.1} parent=1 // pred_fallthru
      _
    // Predicated region
    $region78: #{tpu_custom_call.1} parent=1 // pred_check
      _
    $region79: #{tpu_custom_call.1} parent=1 // pred_check_branch
      %170 = sbr.rel (0) target = $region81
    $region80: #{tpu_custom_call.1} parent=1 // pred_region
      %172 = dma.done [#allocation12], 4096
    $region81: #{tpu_custom_call.1} parent=1 // pred_fallthru
      _
    // Predicated region
    $region82: #{tpu_custom_call.1} parent=1 // pred_check
      _
    $region83: #{tpu_custom_call.1} parent=1 // pred_check_branch
      %174 = sbr.rel (0) target = $region85
    $region84: #{tpu_custom_call.1} parent=1 // pred_region
      %176 = dma.done [#allocation12], 2048
    $region85: #{tpu_custom_call.1} parent=1 // pred_fallthru
      _
    // Predicated region
    $region86: #{tpu_custom_call.1} parent=1 // pred_check
      _
    $region87: #{tpu_custom_call.1} parent=1 // pred_check_branch
      %178 = sbr.rel (0) target = $region89
    $region88: #{tpu_custom_call.1} parent=1 // pred_region
      %180 = dma.done [#allocation15], 4096
    $region89: #{tpu_custom_call.1} parent=1 // pred_fallthru
      _
    // Predicated region
    $region90: #{tpu_custom_call.1} parent=1 // pred_check
      _
    $region91: #{tpu_custom_call.1} parent=1 // pred_check_branch
      %182 = sbr.rel (0) target = $region93
    $region92: #{tpu_custom_call.1} parent=1 // pred_region
      %184 = dma.done [#allocation15], 2048
    $region93: #{tpu_custom_call.1} parent=1 // pred_fallthru
      _
    %v185 = vld [vmem:[#allocation2] sm:$0xff]
    %v186 = vld [vmem:[#allocation7] sm:$0xff]
    %v187 = vld [vmem:[#allocation7 + $0x8] sm:$0xff]
    %v188 = vld [vmem:[#allocation7 + $0x10] sm:$0xff]
    %v189 = vld [vmem:[#allocation7 + $0x18] sm:$0xff]
    %v190 = vld [vmem:[#allocation7 + $0x20] sm:$0xff]
    %v191 = vld [vmem:[#allocation7 + $0x28] sm:$0xff]
    %v192 = vld [vmem:[#allocation7 + $0x30] sm:$0xff]
    %v193 = vld [vmem:[#allocation7 + $0x38] sm:$0xff]
    %v194 = vld [vmem:[#allocation7 + $0x40] sm:$0xff]
    %v195 = vld [vmem:[#allocation7 + $0x48] sm:$0xff]
    %v196 = vld [vmem:[#allocation7 + $0x50] sm:$0xff]
    %v197 = vld [vmem:[#allocation7 + $0x58] sm:$0xff]
    %v198 = vld [vmem:[#allocation7 + $0x60] sm:$0xff]
    %v199 = vld [vmem:[#allocation7 + $0x68] sm:$0xff]
    %v200 = vld [vmem:[#allocation7 + $0x70] sm:$0xff]
    %v201 = vld [vmem:[#allocation7 + $0x78] sm:$0xff]
    %v202 = vld [vmem:[#allocation8] sm:$0x1]
    %v204 = vperm.slane %v202, 0
    %206 = vmatpush.msra.mxu0 %v201
    %207 = vmatpush.msra.mxu0 %v200
    %208 = vmatpush.msra.mxu0 %v199
    %209 = vmatpush.msra.mxu0 %v198
    %210 = vmatpush.msra.mxu0 %v197
    %211 = vmatpush.msra.mxu0 %v196
    %212 = vmatpush.msra.mxu0 %v195
    %213 = vmatpush.msra.mxu0 %v194
    %214 = vmatpush.msra.mxu0 %v193
    %215 = vmatpush.msra.mxu0 %v192
    %216 = vmatpush.msra.mxu0 %v191
    %217 = vmatpush.msra.mxu0 %v190
    %218 = vmatpush.msra.mxu0 %v189
    %219 = vmatpush.msra.mxu0 %v188
    %220 = vmatpush.msra.mxu0 %v187
    %221 = vmatpush.msra.mxu0 %v186
    %222 = vmatmul.f32.gmra.mxu0 %v185
    %v223 = vpop.f32.mrf.mxu0
    %v224 = vadd.f32 %v204, %v223
    %225 = vdwg.mxu0
    %v226 = vmax.f32 %v224, 0.0
    %v227 = vld [vmem:[#allocation10] sm:$0xff]
    %v228 = vld [vmem:[#allocation10 + $0x8] sm:$0xff]
    %v229 = vld [vmem:[#allocation10 + $0x10] sm:$0xff]
    %v230 = vld [vmem:[#allocation10 + $0x18] sm:$0xff]
    %v231 = vld [vmem:[#allocation10 + $0x20] sm:$0xff]
    %v232 = vld [vmem:[#allocation10 + $0x28] sm:$0xff]
    %v233 = vld [vmem:[#allocation10 + $0x30] sm:$0xff]
    %v234 = vld [vmem:[#allocation10 + $0x38] sm:$0xff]
    %v235 = vld [vmem:[#allocation10 + $0x40] sm:$0xff]
    %v236 = vld [vmem:[#allocation10 + $0x48] sm:$0xff]
    %v237 = vld [vmem:[#allocation10 + $0x50] sm:$0xff]
    %v238 = vld [vmem:[#allocation10 + $0x58] sm:$0xff]
    %v239 = vld [vmem:[#allocation10 + $0x60] sm:$0xff]
    %v240 = vld [vmem:[#allocation10 + $0x68] sm:$0xff]
    %v241 = vld [vmem:[#allocation10 + $0x70] sm:$0xff]
    %v242 = vld [vmem:[#allocation10 + $0x78] sm:$0xff]
    %v243 = vld [vmem:[%s5] sm:$0x1]
    %v245 = vperm.slane %v243, 0
    %247 = vmatpush.msra.mxu0 %v242
    %248 = vmatpush.msra.mxu0 %v241
    %249 = vmatpush.msra.mxu0 %v240
    %250 = vmatpush.msra.mxu0 %v239
    %251 = vmatpush.msra.mxu0 %v238
    %252 = vmatpush.msra.mxu0 %v237
    %253 = vmatpush.msra.mxu0 %v236
    %254 = vmatpush.msra.mxu0 %v235
    %255 = vmatpush.msra.mxu0 %v234
    %256 = vmatpush.msra.mxu0 %v233
    %257 = vmatpush.msra.mxu0 %v232
    %258 = vmatpush.msra.mxu0 %v231
    %259 = vmatpush.msra.mxu0 %v230
    %260 = vmatpush.msra.mxu0 %v229
    %261 = vmatpush.msra.mxu0 %v228
    %262 = vmatpush.msra.mxu0 %v227
    %263 = vmatmul.f32.gmra.mxu0 %v226
    %v264 = vpop.f32.mrf.mxu0
    %v265 = vadd.f32 %v245, %v264
    %266 = vdwg.mxu0
    %v267 = vmax.f32 %v265, 0.0
    %s268 = scalar_lea.vmem [#allocation10], 128
    %v269 = vld [vmem:[%s268] sm:$0xff]
    %v270 = vld [vmem:[%s268 + $0x8] sm:$0xff]
    %v271 = vld [vmem:[%s268 + $0x10] sm:$0xff]
    %v272 = vld [vmem:[%s268 + $0x18] sm:$0xff]
    %v273 = vld [vmem:[%s268 + $0x20] sm:$0xff]
    %v274 = vld [vmem:[%s268 + $0x28] sm:$0xff]
    %v275 = vld [vmem:[%s268 + $0x30] sm:$0xff]
    %v276 = vld [vmem:[%s268 + $0x38] sm:$0xff]
    %v277 = vld [vmem:[%s268 + $0x40] sm:$0xff]
    %v278 = vld [vmem:[%s268 + $0x48] sm:$0xff]
    %v279 = vld [vmem:[%s268 + $0x50] sm:$0xff]
    %v280 = vld [vmem:[%s268 + $0x58] sm:$0xff]
    %v281 = vld [vmem:[%s268 + $0x60] sm:$0xff]
    %v282 = vld [vmem:[%s268 + $0x68] sm:$0xff]
    %v283 = vld [vmem:[%s268 + $0x70] sm:$0xff]
    %v284 = vld [vmem:[%s268 + $0x78] sm:$0xff]
    %s285 = scalar_lea.vmem %s5, 1
    %v286 = vld [vmem:[%s285] sm:$0x1]
    %v288 = vperm.slane %v286, 0
    %290 = vmatpush.msra.mxu0 %v284
    %291 = vmatpush.msra.mxu0 %v283
    %292 = vmatpush.msra.mxu0 %v282
    %293 = vmatpush.msra.mxu0 %v281
    %294 = vmatpush.msra.mxu0 %v280
    %295 = vmatpush.msra.mxu0 %v279
    %296 = vmatpush.msra.mxu0 %v278
    %297 = vmatpush.msra.mxu0 %v277
    %298 = vmatpush.msra.mxu0 %v276
    %299 = vmatpush.msra.mxu0 %v275
    %300 = vmatpush.msra.mxu0 %v274
    %301 = vmatpush.msra.mxu0 %v273
    %302 = vmatpush.msra.mxu0 %v272
    %303 = vmatpush.msra.mxu0 %v271
    %304 = vmatpush.msra.mxu0 %v270
    %305 = vmatpush.msra.mxu0 %v269
    %306 = vmatmul.f32.gmra.mxu0 %v267
    %v307 = vpop.f32.mrf.mxu0
    %v308 = vadd.f32 %v288, %v307
    %309 = vdwg.mxu0
    %v310 = vmax.f32 %v308, 0.0
    %v311 = vld [vmem:[#allocation11] sm:$0xff]
    %v312 = vld [vmem:[#allocation11 + $0x8] sm:$0xff]
    %v313 = vld [vmem:[#allocation11 + $0x10] sm:$0xff]
    %v314 = vld [vmem:[#allocation11 + $0x18] sm:$0xff]
    %v315 = vld [vmem:[#allocation11 + $0x20] sm:$0xff]
    %v316 = vld [vmem:[#allocation11 + $0x28] sm:$0xff]
    %v317 = vld [vmem:[#allocation11 + $0x30] sm:$0xff]
    %v318 = vld [vmem:[#allocation11 + $0x38] sm:$0xff]
    %v319 = vld [vmem:[#allocation11 + $0x40] sm:$0xff]
    %v320 = vld [vmem:[#allocation11 + $0x48] sm:$0xff]
    %v321 = vld [vmem:[#allocation11 + $0x50] sm:$0xff]
    %v322 = vld [vmem:[#allocation11 + $0x58] sm:$0xff]
    %v323 = vld [vmem:[#allocation11 + $0x60] sm:$0xff]
    %v324 = vld [vmem:[#allocation11 + $0x68] sm:$0xff]
    %v325 = vld [vmem:[#allocation11 + $0x70] sm:$0xff]
    %v326 = vld [vmem:[#allocation11 + $0x78] sm:$0xff]
    %v327 = vld [vmem:[#allocation11 + $0x80] sm:$0xff]
    %v328 = vld [vmem:[#allocation11 + $0x88] sm:$0xff]
    %v329 = vld [vmem:[#allocation11 + $0x90] sm:$0xff]
    %v330 = vld [vmem:[#allocation11 + $0x98] sm:$0xff]
    %v331 = vld [vmem:[#allocation11 + $0xa0] sm:$0xff]
    %v332 = vld [vmem:[#allocation11 + $0xa8] sm:$0xff]
    %v333 = vld [vmem:[#allocation11 + $0xb0] sm:$0xff]
    %v334 = vld [vmem:[#allocation11 + $0xb8] sm:$0xff]
    %v335 = vld [vmem:[#allocation11 + $0xc0] sm:$0xff]
    %v336 = vld [vmem:[#allocation11 + $0xc8] sm:$0xff]
    %v337 = vld [vmem:[#allocation11 + $0xd0] sm:$0xff]
    %v338 = vld [vmem:[#allocation11 + $0xd8] sm:$0xff]
    %v339 = vld [vmem:[#allocation11 + $0xe0] sm:$0xff]
    %v340 = vld [vmem:[#allocation11 + $0xe8] sm:$0xff]
    %v341 = vld [vmem:[#allocation11 + $0xf0] sm:$0xff]
    %v342 = vld [vmem:[#allocation11 + $0xf8] sm:$0xff]
    %v343 = vld [vmem:[%s7] sm:$0x3]
    %v345 = vperm.slane %v343, 0
    %v346 = vperm.slane %v343, 1
    %349 = vmatpush.msra.mxu0 %v341
    %350 = vmatpush.msra.mxu0 %v339
    %351 = vmatpush.msra.mxu0 %v337
    %352 = vmatpush.msra.mxu0 %v335
    %353 = vmatpush.msra.mxu0 %v333
    %354 = vmatpush.msra.mxu0 %v331
    %355 = vmatpush.msra.mxu0 %v329
    %356 = vmatpush.msra.mxu0 %v327
    %357 = vmatpush.msra.mxu0 %v325
    %358 = vmatpush.msra.mxu0 %v323
    %359 = vmatpush.msra.mxu0 %v321
    %360 = vmatpush.msra.mxu0 %v319
    %361 = vmatpush.msra.mxu0 %v317
    %362 = vmatpush.msra.mxu0 %v315
    %363 = vmatpush.msra.mxu0 %v313
    %364 = vmatpush.msra.mxu0 %v311
    %365 = vmatmul.f32.gmra.mxu0 %v310
    %v366 = vpop.f32.mrf.mxu0
    %v367 = vadd.f32 %v345, %v366
    %368 = vdwg.mxu0
    %369 = vmatpush.msra.mxu0 %v342
    %370 = vmatpush.msra.mxu0 %v340
    %371 = vmatpush.msra.mxu0 %v338
    %372 = vmatpush.msra.mxu0 %v336
    %373 = vmatpush.msra.mxu0 %v334
    %374 = vmatpush.msra.mxu0 %v332
    %375 = vmatpush.msra.mxu0 %v330
    %376 = vmatpush.msra.mxu0 %v328
    %377 = vmatpush.msra.mxu0 %v326
    %378 = vmatpush.msra.mxu0 %v324
    %379 = vmatpush.msra.mxu0 %v322
    %380 = vmatpush.msra.mxu0 %v320
    %381 = vmatpush.msra.mxu0 %v318
    %382 = vmatpush.msra.mxu0 %v316
    %383 = vmatpush.msra.mxu0 %v314
    %384 = vmatpush.msra.mxu0 %v312
    %385 = vmatmul.f32.gmra.mxu0 %v310
    %v386 = vpop.f32.mrf.mxu0
    %v387 = vadd.f32 %v346, %v386
    %388 = vdwg.mxu0
    %v389 = vmul.f32 %v387, 0.5
    %v390 = vmul.f32 %v389, 1.442695
    %v391 = vpow.pop %v390
    %v392 = vld [vmem:[#allocation5] sm:$0xff]
    %v393 = vmul.f32 %v391, %v392
    %v394 = vadd.f32 %v367, %v393
    %v395 = vld [vmem:[#allocation13] sm:$0xff]
    %v396 = vld [vmem:[#allocation13 + $0x8] sm:$0xff]
    %v397 = vld [vmem:[#allocation13 + $0x10] sm:$0xff]
    %v398 = vld [vmem:[#allocation13 + $0x18] sm:$0xff]
    %v399 = vld [vmem:[#allocation13 + $0x20] sm:$0xff]
    %v400 = vld [vmem:[#allocation13 + $0x28] sm:$0xff]
    %v401 = vld [vmem:[#allocation13 + $0x30] sm:$0xff]
    %v402 = vld [vmem:[#allocation13 + $0x38] sm:$0xff]
    %v403 = vld [vmem:[#allocation13 + $0x40] sm:$0xff]
    %v404 = vld [vmem:[#allocation13 + $0x48] sm:$0xff]
    %v405 = vld [vmem:[#allocation13 + $0x50] sm:$0xff]
    %v406 = vld [vmem:[#allocation13 + $0x58] sm:$0xff]
    %v407 = vld [vmem:[#allocation13 + $0x60] sm:$0xff]
    %v408 = vld [vmem:[#allocation13 + $0x68] sm:$0xff]
    %v409 = vld [vmem:[#allocation13 + $0x70] sm:$0xff]
    %v410 = vld [vmem:[#allocation13 + $0x78] sm:$0xff]
    %v411 = vld [vmem:[%s9] sm:$0x1]
    %v413 = vperm.slane %v411, 0
    %415 = vmatpush.msra.mxu0 %v410
    %416 = vmatpush.msra.mxu0 %v409
    %417 = vmatpush.msra.mxu0 %v408
    %418 = vmatpush.msra.mxu0 %v407
    %419 = vmatpush.msra.mxu0 %v406
    %420 = vmatpush.msra.mxu0 %v405
    %421 = vmatpush.msra.mxu0 %v404
    %422 = vmatpush.msra.mxu0 %v403
    %423 = vmatpush.msra.mxu0 %v402
    %424 = vmatpush.msra.mxu0 %v401
    %425 = vmatpush.msra.mxu0 %v400
    %426 = vmatpush.msra.mxu0 %v399
    %427 = vmatpush.msra.mxu0 %v398
    %428 = vmatpush.msra.mxu0 %v397
    %429 = vmatpush.msra.mxu0 %v396
    %430 = vmatpush.msra.mxu0 %v395
    %431 = vmatmul.f32.gmra.mxu0 %v394
    %v432 = vpop.f32.mrf.mxu0
    %v433 = vadd.f32 %v413, %v432
    %434 = vdwg.mxu0
    %v435 = vmax.f32 %v433, 0.0
    %v436 = vld [vmem:[#allocation14] sm:$0xff]
    %v437 = vld [vmem:[#allocation14 + $0x8] sm:$0xff]
    %v438 = vld [vmem:[#allocation14 + $0x10] sm:$0xff]
    %v439 = vld [vmem:[#allocation14 + $0x18] sm:$0xff]
    %v440 = vld [vmem:[#allocation14 + $0x20] sm:$0xff]
    %v441 = vld [vmem:[#allocation14 + $0x28] sm:$0xff]
    %v442 = vld [vmem:[#allocation14 + $0x30] sm:$0xff]
    %v443 = vld [vmem:[#allocation14 + $0x38] sm:$0xff]
    %v444 = vld [vmem:[#allocation14 + $0x40] sm:$0xff]
    %v445 = vld [vmem:[#allocation14 + $0x48] sm:$0xff]
    %v446 = vld [vmem:[#allocation14 + $0x50] sm:$0xff]
    %v447 = vld [vmem:[#allocation14 + $0x58] sm:$0xff]
    %v448 = vld [vmem:[#allocation14 + $0x60] sm:$0xff]
    %v449 = vld [vmem:[#allocation14 + $0x68] sm:$0xff]
    %v450 = vld [vmem:[#allocation14 + $0x70] sm:$0xff]
    %v451 = vld [vmem:[#allocation14 + $0x78] sm:$0xff]
    %v452 = vld [vmem:[%s11] sm:$0x1]
    %v454 = vperm.slane %v452, 0
    %456 = vmatpush.msra.mxu0 %v451
    %457 = vmatpush.msra.mxu0 %v450
    %458 = vmatpush.msra.mxu0 %v449
    %459 = vmatpush.msra.mxu0 %v448
    %460 = vmatpush.msra.mxu0 %v447
    %461 = vmatpush.msra.mxu0 %v446
    %462 = vmatpush.msra.mxu0 %v445
    %463 = vmatpush.msra.mxu0 %v444
    %464 = vmatpush.msra.mxu0 %v443
    %465 = vmatpush.msra.mxu0 %v442
    %466 = vmatpush.msra.mxu0 %v441
    %467 = vmatpush.msra.mxu0 %v440
    %468 = vmatpush.msra.mxu0 %v439
    %469 = vmatpush.msra.mxu0 %v438
    %470 = vmatpush.msra.mxu0 %v437
    %471 = vmatpush.msra.mxu0 %v436
    %472 = vmatmul.f32.gmra.mxu0 %v435
    %v473 = vpop.f32.mrf.mxu0
    %v474 = vadd.f32 %v454, %v473
    %475 = vdwg.mxu0
    %v476 = vmax.f32 %v474, 0.0
    %s477 = scalar_lea.vmem [#allocation14], 128
    %v478 = vld [vmem:[%s477] sm:$0xff]
    %v479 = vld [vmem:[%s477 + $0x8] sm:$0xff]
    %v480 = vld [vmem:[%s477 + $0x10] sm:$0xff]
    %v481 = vld [vmem:[%s477 + $0x18] sm:$0xff]
    %v482 = vld [vmem:[%s477 + $0x20] sm:$0xff]
    %v483 = vld [vmem:[%s477 + $0x28] sm:$0xff]
    %v484 = vld [vmem:[%s477 + $0x30] sm:$0xff]
    %v485 = vld [vmem:[%s477 + $0x38] sm:$0xff]
    %v486 = vld [vmem:[%s477 + $0x40] sm:$0xff]
    %v487 = vld [vmem:[%s477 + $0x48] sm:$0xff]
    %v488 = vld [vmem:[%s477 + $0x50] sm:$0xff]
    %v489 = vld [vmem:[%s477 + $0x58] sm:$0xff]
    %v490 = vld [vmem:[%s477 + $0x60] sm:$0xff]
    %v491 = vld [vmem:[%s477 + $0x68] sm:$0xff]
    %v492 = vld [vmem:[%s477 + $0x70] sm:$0xff]
    %v493 = vld [vmem:[%s477 + $0x78] sm:$0xff]
    %s494 = scalar_lea.vmem %s11, 1
    %v495 = vld [vmem:[%s494] sm:$0x1]
    %v497 = vperm.slane %v495, 0
    %499 = vmatpush.msra.mxu0 %v493
    %500 = vmatpush.msra.mxu0 %v492
    %501 = vmatpush.msra.mxu0 %v491
    %502 = vmatpush.msra.mxu0 %v490
    %503 = vmatpush.msra.mxu0 %v489
    %504 = vmatpush.msra.mxu0 %v488
    %505 = vmatpush.msra.mxu0 %v487
    %506 = vmatpush.msra.mxu0 %v486
    %507 = vmatpush.msra.mxu0 %v485
    %508 = vmatpush.msra.mxu0 %v484
    %509 = vmatpush.msra.mxu0 %v483
    %510 = vmatpush.msra.mxu0 %v482
    %511 = vmatpush.msra.mxu0 %v481
    %512 = vmatpush.msra.mxu0 %v480
    %513 = vmatpush.msra.mxu0 %v479
    %514 = vmatpush.msra.mxu0 %v478
    %515 = vmatmul.f32.gmra.mxu0 %v476
    %v516 = vpop.f32.mrf.mxu0
    %v517 = vadd.f32 %v497, %v516
    %518 = vdwg.mxu0
    %v519 = vmax.f32 %v517, 0.0
    %v520 = vld [vmem:[#allocation16] sm:$0xff]
    %v521 = vld [vmem:[#allocation16 + $0x8] sm:$0xff]
    %v522 = vld [vmem:[#allocation16 + $0x10] sm:$0xff]
    %v523 = vld [vmem:[#allocation16 + $0x18] sm:$0xff]
    %v524 = vld [vmem:[#allocation16 + $0x20] sm:$0xff]
    %v525 = vld [vmem:[#allocation16 + $0x28] sm:$0xff]
    %v526 = vld [vmem:[#allocation16 + $0x30] sm:$0xff]
    %v527 = vld [vmem:[#allocation16 + $0x38] sm:$0xff]
    %v528 = vld [vmem:[#allocation16 + $0x40] sm:$0xff]
    %v529 = vld [vmem:[#allocation16 + $0x48] sm:$0xff]
    %v530 = vld [vmem:[#allocation16 + $0x50] sm:$0xff]
    %v531 = vld [vmem:[#allocation16 + $0x58] sm:$0xff]
    %v532 = vld [vmem:[#allocation16 + $0x60] sm:$0xff]
    %v533 = vld [vmem:[#allocation16 + $0x68] sm:$0xff]
    %v534 = vld [vmem:[#allocation16 + $0x70] sm:$0xff]
    %v535 = vld [vmem:[#allocation16 + $0x78] sm:$0xff]
    %v536 = vld [vmem:[%s13] sm:$0x1]
    %v538 = vperm.slane %v536, 0
    %540 = vmatpush.msra.mxu0 %v535
    %541 = vmatpush.msra.mxu0 %v534
    %542 = vmatpush.msra.mxu0 %v533
    %543 = vmatpush.msra.mxu0 %v532
    %544 = vmatpush.msra.mxu0 %v531
    %545 = vmatpush.msra.mxu0 %v530
    %546 = vmatpush.msra.mxu0 %v529
    %547 = vmatpush.msra.mxu0 %v528
    %548 = vmatpush.msra.mxu0 %v527
    %549 = vmatpush.msra.mxu0 %v526
    %550 = vmatpush.msra.mxu0 %v525
    %551 = vmatpush.msra.mxu0 %v524
    %552 = vmatpush.msra.mxu0 %v523
    %553 = vmatpush.msra.mxu0 %v522
    %554 = vmatpush.msra.mxu0 %v521
    %555 = vmatpush.msra.mxu0 %v520
    %556 = vmatmul.f32.gmra.mxu0 %v519
    %v557 = vpop.f32.mrf.mxu0
    %v558 = vadd.f32 %v538, %v557
    %559 = vdwg.mxu0
    %v560 = vxor.u32 %v558, 2147483648
    %v561 = vmul.f32 %v560, 1.442695
    %v562 = vpow.pop %v561
    %v563 = vadd.f32 %v562, 1.0
    %v564 = vrcp.pop %v563
    %v565 = vmul.f32 %v563, %v564
    %v566 = vsub.f32 1.0, %v565
    %v567 = vmul.f32 %v564, %v566
    %v568 = vadd.f32 %v564, %v567
    %vm569 = vweird.f32 %v563
    %vm570 = vweird.f32 %v564
    %vm571 = vmor %vm569, %vm570
    %v572 = vsel %vm571, %v564, %v568
    %v573 = vand.u32 2147483647, %v563
    %vm574 = vcmp.eq.f32.partialorder %v573, 8.507059e+37
    %v575 = vand.u32 %v563, 2147483648
    %v576 = vor.u32 1.1754944e-38, %v575
    %v577 = vsel %vm574, %v576, %v572
    %v578 = vmul.f32 1.0, %v577
    %579 = vst [vmem:[#allocation17] sm:$0xff] %v578
    %580 = vst [vmem:[#allocation18] sm:$0xff] %v367
    %581 = vst [vmem:[#allocation18 + $0x8] sm:$0xff] %v387
    %582 = vst [vmem:[#allocation18 + $0x10] sm:$0xff] %v394
    // Predicated region
    $region94: #{tpu_custom_call.1} parent=1 // pred_check
      _
    $region95: #{tpu_custom_call.1} parent=1 // pred_check_branch
      %584 = sbr.rel (0) target = $region97
    $region96: #{tpu_custom_call.1} parent=1 // pred_region
      %586 = vsyncadd [#allocation4], 0
      %s588 = sshll.u32 [#allocation17], 4
      %s589 = int_to_ptr.vmem [resolvable:$true] %s588
      %s590 = sshll.u32 %s14, 4
      %s591 = int_to_ptr.hbm [resolvable:$true] %s590
      %593 = dma.vmem_to_hbm [thread:$0]  %s589, 128, %s591, [#allocation4]
    $region97: #{tpu_custom_call.1} parent=1 // pred_fallthru
      _
    // Predicated region
    $region98: #{tpu_custom_call.1} parent=1 // pred_check
      _
    $region99: #{tpu_custom_call.1} parent=1 // pred_check_branch
      %595 = sbr.rel (0) target = $region101
    $region100: #{tpu_custom_call.1} parent=1 // pred_region
      %597 = vsyncadd [#allocation19], 0
      %s599 = sshll.u32 [#allocation18], 4
      %s600 = int_to_ptr.vmem [resolvable:$true] %s599
      %s601 = sshll.u32 %s15, 4
      %s602 = int_to_ptr.hbm [resolvable:$true] %s601
      %604 = dma.vmem_to_hbm [thread:$0]  %s600, 384, %s602, [#allocation19]
    $region101: #{tpu_custom_call.1} parent=1 // pred_fallthru
      _
    // Predicated region
    $region102: #{tpu_custom_call.1} parent=1 // pred_check
      _
    $region103: #{tpu_custom_call.1} parent=1 // pred_check_branch
      %606 = sbr.rel (0) target = $region105
    $region104: #{tpu_custom_call.1} parent=1 // pred_region
      %608 = dma.done [#allocation4], 128
    $region105: #{tpu_custom_call.1} parent=1 // pred_fallthru
      _
    // Predicated region
    $region106: #{tpu_custom_call.1} parent=1 // pred_check
      _
    $region107: #{tpu_custom_call.1} parent=1 // pred_check_branch
      %610 = sbr.rel (0) target = $region109
    $region108: #{tpu_custom_call.1} parent=1 // pred_region
      %612 = dma.done [#allocation19], 384
    $region109: #{tpu_custom_call.1} parent=1 // pred_fallthru
      _
    %613 = vsyncpa [#allocation3], 1
    %614 = vsyncpa [#allocation6], 1
    %615 = vsyncpa [#allocation9], 1
    %616 = vsyncpa [#allocation12], 1
    %617 = vsyncpa [#allocation15], 1
    %618 = vsyncpa [#allocation4], 1
    %619 = vsyncpa [#allocation19], 1

// kernel: tpu_custom_call.1
$region0: #{tpu_custom_call.1}
  #allocation0 [shape = 'u32[]', space=smem, size = 0x4, offset = 0x4, fixed_abs, tag = 'smem constant byte address 0x4 - core index']
  #allocation1 [shape = 'u32[72,128]{1,0:T(1,128)}', space=vmem, size = 0x9000, scoped, tag = 'internal scratch']
  %s0 = inlined_call_operand.hbm [shape: f32[8,128], index: 0, kind: input, shape index: {}]
  %s1 = inlined_call_operand.hbm [shape: f32[8,128], index: 1, kind: input, shape index: {}]
  %s2 = inlined_call_operand.hbm [shape: f32[128,128], index: 2, kind: input, shape index: {}]
  %s3 = inlined_call_operand.hbm [shape: f32[1,128], index: 3, kind: input, shape index: {}]
  %s4 = inlined_call_operand.hbm [shape: f32[2,128,128], index: 4, kind: input, shape index: {}]
  %s5 = inlined_call_operand.vmem [shape: f32[2,1,128], index: 5, kind: input, shape index: {}]
  %s6 = inlined_call_operand.hbm [shape: f32[128,256], index: 6, kind: input, shape index: {}]
  %s7 = inlined_call_operand.vmem [shape: f32[1,256], index: 7, kind: input, shape index: {}]
  %s8 = inlined_call_operand.hbm [shape: f32[128,128], index: 8, kind: input, shape index: {}]
  %s9 = inlined_call_operand.vmem [shape: f32[1,128], index: 9, kind: input, shape index: {}]
  %s10 = inlined_call_operand.hbm [shape: f32[2,128,128], index: 10, kind: input, shape index: {}]
  %s11 = inlined_call_operand.vmem [shape: f32[2,1,128], index: 11, kind: input, shape index: {}]
  %s12 = inlined_call_operand.hbm [shape: f32[128,128], index: 12, kind: input, shape index: {}]
  %s13 = inlined_call_operand.vmem [shape: f32[1,128], index: 13, kind: input, shape index: {}]
  %s14 = inlined_call_operand.hbm [shape: f32[8,128], index: 14, kind: output, shape index: {0}]
  %s15 = inlined_call_operand.hbm [shape: f32[8,384], index: 15, kind: output, shape index: {1}]
  %16 = xla_tuple %s14, %s15
  %s17 = sld [smem:[#allocation0]]
  $region110: #{tpu_custom_call.1} parent=0
    _
  %s19 = ssub.s32 1, %s17
  %s20 = scalar_select 0, %s19, %s17
  $region1: #{tpu_custom_call.1} parent=0
    #allocation2 [shape = 'u8[4096]{0}', space=vmem, size = 0x1000, scoped, tag = 'input window, operand 0, single buffered']
    #allocation3 [shape = 's32[1]{0}', space=sflag, size = 0x4, scoped, tag = 'scoped memory for tpu_custom_call.1']
    #allocation4 [shape = 's32[1]{0}', space=sflag, size = 0x4, scoped, tag = 'scoped memory for tpu_custom_call.1']
    #allocation5 [shape = 'u8[4096]{0}', space=vmem, size = 0x1000, scoped, tag = 'input window, operand 1, single buffered']
    #allocation6 [shape = 's32[1]{0}', space=sflag, size = 0x4, scoped, tag = 'scoped memory for tpu_custom_call.1']
    #allocation7 [shape = 'u8[65536]{0}', space=vmem, size = 0x10000, scoped, tag = 'input window, operand 2, single buffered']
    #allocation8 [shape = 'u8[512]{0}', space=vmem, size = 0x400, scoped, tag = 'input window, operand 3, single buffered']
    #allocation9 [shape = 's32[1]{0}', space=sflag, size = 0x4, scoped, tag = 'scoped memory for tpu_custom_call.1']
    #allocation10 [shape = 'u8[131072]{0}', space=vmem, size = 0x20000, scoped, tag = 'input window, operand 4, single buffered']
    #allocation11 [shape = 'u8[131072]{0}', space=vmem, size = 0x20000, scoped, tag = 'input window, operand 6, single buffered']
    #allocation12 [shape = 's32[1]{0}', space=sflag, size = 0x4, scoped, tag = 'scoped memory for tpu_custom_call.1']
    #allocation13 [shape = 'u8[65536]{0}', space=vmem, size = 0x10000, scoped, tag = 'input window, operand 8, single buffered']
    #allocation14 [shape = 'u8[131072]{0}', space=vmem, size = 0x20000, scoped, tag = 'input window, operand 10, single buffered']
    #allocation15 [shape = 's32[1]{0}', space=sflag, size = 0x4, scoped, tag = 'scoped memory for tpu_custom_call.1']
    #allocation16 [shape = 'u8[65536]{0}', space=vmem, size = 0x10000, scoped, tag = 'input window, operand 12, single buffered']
    #allocation17 [shape = 'u8[4096]{0}', space=vmem, size = 0x1000, scoped, tag = 'output window, operand 0, single buffered']
    #allocation18 [shape = 'u8[12288]{0}', space=vmem, size = 0x3000, scoped, tag = 'output window, operand 1, single buffered']
    #allocation19 [shape = 's32[1]{0}', space=sflag, size = 0x4, scoped, tag = 'scoped memory for tpu_custom_call.1']
    %21 = vsyncpa [#allocation3], 0
    %22 = vsyncpa [#allocation6], 0
    %23 = vsyncpa [#allocation9], 0
    %24 = vsyncpa [#allocation12], 0
    %25 = vsyncpa [#allocation15], 0
    %26 = vsyncpa [#allocation4], 0
    %27 = vsyncpa [#allocation19], 0
    // Predicated region
    $region2: #{tpu_custom_call.1} parent=1 // pred_check
      _
    $region3: #{tpu_custom_call.1} parent=1 // pred_check_branch
      %29 = sbr.rel (0) target = $region5
    $region4: #{tpu_custom_call.1} parent=1 // pred_region
      %31 = vsyncadd [#allocation3], 0
      %s33 = sshll.u32 %s0, 4
      %s34 = int_to_ptr.hbm [resolvable:$true] %s33
      %s35 = sshll.u32 [#allocation2], 4
      %s36 = int_to_ptr.vmem [resolvable:$true] %s35
      %38 = dma.hbm_to_vmem [thread:$0]  %s34, 128, %s36, [#allocation3]
    $region5: #{tpu_custom_call.1} parent=1 // pred_fallthru
      _
    // Predicated region
    $region6: #{tpu_custom_call.1} parent=1 // pred_check
      _
    $region7: #{tpu_custom_call.1} parent=1 // pred_check_branch
      %40 = sbr.rel (0) target = $region9
    $region8: #{tpu_custom_call.1} parent=1 // pred_region
      %42 = vsyncadd [#allocation6], 0
      %s44 = sshll.u32 %s1, 4
      %s45 = int_to_ptr.hbm [resolvable:$true] %s44
      %s46 = sshll.u32 [#allocation5], 4
      %s47 = int_to_ptr.vmem [resolvable:$true] %s46
      %49 = dma.hbm_to_vmem [thread:$0]  %s45, 128, %s47, [#allocation6]
    $region9: #{tpu_custom_call.1} parent=1 // pred_fallthru
      _
    // Predicated region
    $region10: #{tpu_custom_call.1} parent=1 // pred_check
      _
    $region11: #{tpu_custom_call.1} parent=1 // pred_check_branch
      %51 = sbr.rel (0) target = $region13
    $region12: #{tpu_custom_call.1} parent=1 // pred_region
      %53 = vsyncadd [#allocation6], 0
      %s54 = sshll.u32 %s2, 4
      %s55 = int_to_ptr.hbm [resolvable:$true] %s54
      %s56 = sshll.u32 [#allocation7], 4
      %s57 = int_to_ptr.vmem [resolvable:$true] %s56
      %62 = dma.hbm_to_vmem [thread:$0]  %s55, 2048, %s57, [#allocation6], 128, 128, 8
    $region13: #{tpu_custom_call.1} parent=1 // pred_fallthru
      _
    // Predicated region
    $region14: #{tpu_custom_call.1} parent=1 // pred_check
      _
    $region15: #{tpu_custom_call.1} parent=1 // pred_check_branch
      %64 = sbr.rel (0) target = $region17
    $region16: #{tpu_custom_call.1} parent=1 // pred_region
      %66 = vsyncadd [#allocation9], 0
      %s68 = sshll.u32 %s3, 4
      %s69 = int_to_ptr.hbm [resolvable:$true] %s68
      %s70 = sshll.u32 [#allocation8], 4
      %s71 = int_to_ptr.vmem [resolvable:$true] %s70
      %73 = dma.hbm_to_vmem [thread:$0]  %s69, 16, %s71, [#allocation9]
    $region17: #{tpu_custom_call.1} parent=1 // pred_fallthru
      _
    // Predicated region
    $region18: #{tpu_custom_call.1} parent=1 // pred_check
      _
    $region19: #{tpu_custom_call.1} parent=1 // pred_check_branch
      %75 = sbr.rel (0) target = $region21
    $region20: #{tpu_custom_call.1} parent=1 // pred_region
      %77 = vsyncadd [#allocation9], 0
      %s78 = sshll.u32 %s4, 4
      %s79 = int_to_ptr.hbm [resolvable:$true] %s78
      %s80 = sshll.u32 [#allocation10], 4
      %s81 = int_to_ptr.vmem [resolvable:$true] %s80
      %86 = dma.hbm_to_vmem [thread:$0]  %s79, 4096, %s81, [#allocation9], 128, 128, 8
    $region21: #{tpu_custom_call.1} parent=1 // pred_fallthru
      _
    // Predicated region
    $region22: #{tpu_custom_call.1} parent=1 // pred_check
      _
    $region23: #{tpu_custom_call.1} parent=1 // pred_check_branch
      %88 = sbr.rel (0) target = $region25
    $region24: #{tpu_custom_call.1} parent=1 // pred_region
      _
    $region25: #{tpu_custom_call.1} parent=1 // pred_fallthru
      _
    // Predicated region
    $region26: #{tpu_custom_call.1} parent=1 // pred_check
      _
    $region27: #{tpu_custom_call.1} parent=1 // pred_check_branch
      %90 = sbr.rel (0) target = $region29
    $region28: #{tpu_custom_call.1} parent=1 // pred_region
      %92 = vsyncadd [#allocation12], 0
      %s93 = sshll.u32 %s6, 4
      %s94 = int_to_ptr.hbm [resolvable:$true] %s93
      %s95 = sshll.u32 [#allocation11], 4
      %s96 = int_to_ptr.vmem [resolvable:$true] %s95
      %101 = dma.hbm_to_vmem [thread:$0]  %s94, 4096, %s96, [#allocation12], 256, 256, 16
    $region29: #{tpu_custom_call.1} parent=1 // pred_fallthru
      _
    // Predicated region
    $region30: #{tpu_custom_call.1} parent=1 // pred_check
      _
    $region31: #{tpu_custom_call.1} parent=1 // pred_check_branch
      %103 = sbr.rel (0) target = $region33
    $region32: #{tpu_custom_call.1} parent=1 // pred_region
      _
    $region33: #{tpu_custom_call.1} parent=1 // pred_fallthru
      _
    // Predicated region
    $region34: #{tpu_custom_call.1} parent=1 // pred_check
      _
    $region35: #{tpu_custom_call.1} parent=1 // pred_check_branch
      %105 = sbr.rel (0) target = $region37
    $region36: #{tpu_custom_call.1} parent=1 // pred_region
      %107 = vsyncadd [#allocation12], 0
      %s108 = sshll.u32 %s8, 4
      %s109 = int_to_ptr.hbm [resolvable:$true] %s108
      %s110 = sshll.u32 [#allocation13], 4
      %s111 = int_to_ptr.vmem [resolvable:$true] %s110
      %116 = dma.hbm_to_vmem [thread:$0]  %s109, 2048, %s111, [#allocation12], 128, 128, 8
    $region37: #{tpu_custom_call.1} parent=1 // pred_fallthru
      _
    // Predicated region
    $region38: #{tpu_custom_call.1} parent=1 // pred_check
      _
    $region39: #{tpu_custom_call.1} parent=1 // pred_check_branch
      %118 = sbr.rel (0) target = $region41
    $region40: #{tpu_custom_call.1} parent=1 // pred_region
      _
    $region41: #{tpu_custom_call.1} parent=1 // pred_fallthru
      _
    // Predicated region
    $region42: #{tpu_custom_call.1} parent=1 // pred_check
      _
    $region43: #{tpu_custom_call.1} parent=1 // pred_check_branch
      %120 = sbr.rel (0) target = $region45
    $region44: #{tpu_custom_call.1} parent=1 // pred_region
      %122 = vsyncadd [#allocation15], 0
      %s123 = sshll.u32 %s10, 4
      %s124 = int_to_ptr.hbm [resolvable:$true] %s123
      %s125 = sshll.u32 [#allocation14], 4
      %s126 = int_to_ptr.vmem [resolvable:$true] %s125
      %131 = dma.hbm_to_vmem [thread:$0]  %s124, 4096, %s126, [#allocation15], 128, 128, 8
    $region45: #{tpu_custom_call.1} parent=1 // pred_fallthru
      _
    // Predicated region
    $region46: #{tpu_custom_call.1} parent=1 // pred_check
      _
    $region47: #{tpu_custom_call.1} parent=1 // pred_check_branch
      %133 = sbr.rel (0) target = $region49
    $region48: #{tpu_custom_call.1} parent=1 // pred_region
      _
    $region49: #{tpu_custom_call.1} parent=1 // pred_fallthru
      _
    // Predicated region
    $region50: #{tpu_custom_call.1} parent=1 // pred_check
      _
    $region51: #{tpu_custom_call.1} parent=1 // pred_check_branch
      %135 = sbr.rel (0) target = $region53
    $region52: #{tpu_custom_call.1} parent=1 // pred_region
      %137 = vsyncadd [#allocation15], 0
      %s138 = sshll.u32 %s12, 4
      %s139 = int_to_ptr.hbm [resolvable:$true] %s138
      %s140 = sshll.u32 [#allocation16], 4
      %s141 = int_to_ptr.vmem [resolvable:$true] %s140
      %146 = dma.hbm_to_vmem [thread:$0]  %s139, 2048, %s141, [#allocation15], 128, 128, 8
    $region53: #{tpu_custom_call.1} parent=1 // pred_fallthru
      _
    // Predicated region
    $region54: #{tpu_custom_call.1} parent=1 // pred_check
      _
    $region55: #{tpu_custom_call.1} parent=1 // pred_check_branch
      %148 = sbr.rel (0) target = $region57
    $region56: #{tpu_custom_call.1} parent=1 // pred_region
      _
    $region57: #{tpu_custom_call.1} parent=1 // pred_fallthru
      _
    // Predicated region
    $region58: #{tpu_custom_call.1} parent=1 // pred_check
      _
    $region59: #{tpu_custom_call.1} parent=1 // pred_check_branch
      %150 = sbr.rel (0) target = $region61
    $region60: #{tpu_custom_call.1} parent=1 // pred_region
      %152 = dma.done [#allocation3], 128
    $region61: #{tpu_custom_call.1} parent=1 // pred_fallthru
      _
    // Predicated region
    $region62: #{tpu_custom_call.1} parent=1 // pred_check
      _
    $region63: #{tpu_custom_call.1} parent=1 // pred_check_branch
      %154 = sbr.rel (0) target = $region65
    $region64: #{tpu_custom_call.1} parent=1 // pred_region
      %156 = dma.done [#allocation6], 128
    $region65: #{tpu_custom_call.1} parent=1 // pred_fallthru
      _
    // Predicated region
    $region66: #{tpu_custom_call.1} parent=1 // pred_check
      _
    $region67: #{tpu_custom_call.1} parent=1 // pred_check_branch
      %158 = sbr.rel (0) target = $region69
    $region68: #{tpu_custom_call.1} parent=1 // pred_region
      %160 = dma.done [#allocation6], 2048
    $region69: #{tpu_custom_call.1} parent=1 // pred_fallthru
      _
    // Predicated region
    $region70: #{tpu_custom_call.1} parent=1 // pred_check
      _
    $region71: #{tpu_custom_call.1} parent=1 // pred_check_branch
      %162 = sbr.rel (0) target = $region73
    $region72: #{tpu_custom_call.1} parent=1 // pred_region
      %164 = dma.done [#allocation9], 16
    $region73: #{tpu_custom_call.1} parent=1 // pred_fallthru
      _
    // Predicated region
    $region74: #{tpu_custom_call.1} parent=1 // pred_check
      _
    $region75: #{tpu_custom_call.1} parent=1 // pred_check_branch
      %166 = sbr.rel (0) target = $region77
    $region76: #{tpu_custom_call.1} parent=1 // pred_region
      %168 = dma.done [#allocation9], 4096
    $region77: #{tpu_custom_call.1} parent=1 // pred_fallthru
      _
    // Predicated region
    $region78: #{tpu_custom_call.1} parent=1 // pred_check
      _
    $region79: #{tpu_custom_call.1} parent=1 // pred_check_branch
      %170 = sbr.rel (0) target = $region81
    $region80: #{tpu_custom_call.1} parent=1 // pred_region
      %172 = dma.done [#allocation12], 4096
    $region81: #{tpu_custom_call.1} parent=1 // pred_fallthru
      _
    // Predicated region
    $region82: #{tpu_custom_call.1} parent=1 // pred_check
      _
    $region83: #{tpu_custom_call.1} parent=1 // pred_check_branch
      %174 = sbr.rel (0) target = $region85
    $region84: #{tpu_custom_call.1} parent=1 // pred_region
      %176 = dma.done [#allocation12], 2048
    $region85: #{tpu_custom_call.1} parent=1 // pred_fallthru
      _
    // Predicated region
    $region86: #{tpu_custom_call.1} parent=1 // pred_check
      _
    $region87: #{tpu_custom_call.1} parent=1 // pred_check_branch
      %178 = sbr.rel (0) target = $region89
    $region88: #{tpu_custom_call.1} parent=1 // pred_region
      %180 = dma.done [#allocation15], 4096
    $region89: #{tpu_custom_call.1} parent=1 // pred_fallthru
      _
    // Predicated region
    $region90: #{tpu_custom_call.1} parent=1 // pred_check
      _
    $region91: #{tpu_custom_call.1} parent=1 // pred_check_branch
      %182 = sbr.rel (0) target = $region93
    $region92: #{tpu_custom_call.1} parent=1 // pred_region
      %184 = dma.done [#allocation15], 2048
    $region93: #{tpu_custom_call.1} parent=1 // pred_fallthru
      _
    %v185 = vld [vmem:[#allocation2] sm:$0xff]
    %v186 = vld [vmem:[#allocation7] sm:$0xff]
    %v187 = vld [vmem:[#allocation7 + $0x8] sm:$0xff]
    %v188 = vld [vmem:[#allocation7 + $0x10] sm:$0xff]
    %v189 = vld [vmem:[#allocation7 + $0x18] sm:$0xff]
    %v190 = vld [vmem:[#allocation7 + $0x20] sm:$0xff]
    %v191 = vld [vmem:[#allocation7 + $0x28] sm:$0xff]
    %v192 = vld [vmem:[#allocation7 + $0x30] sm:$0xff]
    %v193 = vld [vmem:[#allocation7 + $0x38] sm:$0xff]
    %v194 = vld [vmem:[#allocation7 + $0x40] sm:$0xff]
    %v195 = vld [vmem:[#allocation7 + $0x48] sm:$0xff]
    %v196 = vld [vmem:[#allocation7 + $0x50] sm:$0xff]
    %v197 = vld [vmem:[#allocation7 + $0x58] sm:$0xff]
    %v198 = vld [vmem:[#allocation7 + $0x60] sm:$0xff]
    %v199 = vld [vmem:[#allocation7 + $0x68] sm:$0xff]
    %v200 = vld [vmem:[#allocation7 + $0x70] sm:$0xff]
    %v201 = vld [vmem:[#allocation7 + $0x78] sm:$0xff]
    %v202 = vld [vmem:[#allocation8] sm:$0x1]
    %v204 = vperm.slane %v202, 0
    %206 = vmatpush.msra.mxu0 %v201
    %207 = vmatpush.msra.mxu0 %v200
    %208 = vmatpush.msra.mxu0 %v199
    %209 = vmatpush.msra.mxu0 %v198
    %210 = vmatpush.msra.mxu0 %v197
    %211 = vmatpush.msra.mxu0 %v196
    %212 = vmatpush.msra.mxu0 %v195
    %213 = vmatpush.msra.mxu0 %v194
    %214 = vmatpush.msra.mxu0 %v193
    %215 = vmatpush.msra.mxu0 %v192
    %216 = vmatpush.msra.mxu0 %v191
    %217 = vmatpush.msra.mxu0 %v190
    %218 = vmatpush.msra.mxu0 %v189
    %219 = vmatpush.msra.mxu0 %v188
    %220 = vmatpush.msra.mxu0 %v187
    %221 = vmatpush.msra.mxu0 %v186
    %222 = vmatmul.f32.gmra.mxu0 %v185
    %v223 = vpop.f32.mrf.mxu0
    %v224 = vadd.f32 %v204, %v223
    %225 = vdwg.mxu0
    %v226 = vmax.f32 %v224, 0.0
    %v227 = vld [vmem:[#allocation10] sm:$0xff]
    %v228 = vld [vmem:[#allocation10 + $0x8] sm:$0xff]
    %v229 = vld [vmem:[#allocation10 + $0x10] sm:$0xff]
    %v230 = vld [vmem:[#allocation10 + $0x18] sm:$0xff]
    %v231 = vld [vmem:[#allocation10 + $0x20] sm:$0xff]
    %v232 = vld [vmem:[#allocation10 + $0x28] sm:$0xff]
    %v233 = vld [vmem:[#allocation10 + $0x30] sm:$0xff]
    %v234 = vld [vmem:[#allocation10 + $0x38] sm:$0xff]
    %v235 = vld [vmem:[#allocation10 + $0x40] sm:$0xff]
    %v236 = vld [vmem:[#allocation10 + $0x48] sm:$0xff]
    %v237 = vld [vmem:[#allocation10 + $0x50] sm:$0xff]
    %v238 = vld [vmem:[#allocation10 + $0x58] sm:$0xff]
    %v239 = vld [vmem:[#allocation10 + $0x60] sm:$0xff]
    %v240 = vld [vmem:[#allocation10 + $0x68] sm:$0xff]
    %v241 = vld [vmem:[#allocation10 + $0x70] sm:$0xff]
    %v242 = vld [vmem:[#allocation10 + $0x78] sm:$0xff]
    %v243 = vld [vmem:[%s5] sm:$0x1]
    %v245 = vperm.slane %v243, 0
    %247 = vmatpush.msra.mxu0 %v242
    %248 = vmatpush.msra.mxu0 %v241
    %249 = vmatpush.msra.mxu0 %v240
    %250 = vmatpush.msra.mxu0 %v239
    %251 = vmatpush.msra.mxu0 %v238
    %252 = vmatpush.msra.mxu0 %v237
    %253 = vmatpush.msra.mxu0 %v236
    %254 = vmatpush.msra.mxu0 %v235
    %255 = vmatpush.msra.mxu0 %v234
    %256 = vmatpush.msra.mxu0 %v233
    %257 = vmatpush.msra.mxu0 %v232
    %258 = vmatpush.msra.mxu0 %v231
    %259 = vmatpush.msra.mxu0 %v230
    %260 = vmatpush.msra.mxu0 %v229
    %261 = vmatpush.msra.mxu0 %v228
    %262 = vmatpush.msra.mxu0 %v227
    %263 = vmatmul.f32.gmra.mxu0 %v226
    %v264 = vpop.f32.mrf.mxu0
    %v265 = vadd.f32 %v245, %v264
    %266 = vdwg.mxu0
    %v267 = vmax.f32 %v265, 0.0
    %s268 = scalar_lea.vmem [#allocation10], 128
    %v269 = vld [vmem:[%s268] sm:$0xff]
    %v270 = vld [vmem:[%s268 + $0x8] sm:$0xff]
    %v271 = vld [vmem:[%s268 + $0x10] sm:$0xff]
    %v272 = vld [vmem:[%s268 + $0x18] sm:$0xff]
    %v273 = vld [vmem:[%s268 + $0x20] sm:$0xff]
    %v274 = vld [vmem:[%s268 + $0x28] sm:$0xff]
    %v275 = vld [vmem:[%s268 + $0x30] sm:$0xff]
    %v276 = vld [vmem:[%s268 + $0x38] sm:$0xff]
    %v277 = vld [vmem:[%s268 + $0x40] sm:$0xff]
    %v278 = vld [vmem:[%s268 + $0x48] sm:$0xff]
    %v279 = vld [vmem:[%s268 + $0x50] sm:$0xff]
    %v280 = vld [vmem:[%s268 + $0x58] sm:$0xff]
    %v281 = vld [vmem:[%s268 + $0x60] sm:$0xff]
    %v282 = vld [vmem:[%s268 + $0x68] sm:$0xff]
    %v283 = vld [vmem:[%s268 + $0x70] sm:$0xff]
    %v284 = vld [vmem:[%s268 + $0x78] sm:$0xff]
    %s285 = scalar_lea.vmem %s5, 1
    %v286 = vld [vmem:[%s285] sm:$0x1]
    %v288 = vperm.slane %v286, 0
    %290 = vmatpush.msra.mxu0 %v284
    %291 = vmatpush.msra.mxu0 %v283
    %292 = vmatpush.msra.mxu0 %v282
    %293 = vmatpush.msra.mxu0 %v281
    %294 = vmatpush.msra.mxu0 %v280
    %295 = vmatpush.msra.mxu0 %v279
    %296 = vmatpush.msra.mxu0 %v278
    %297 = vmatpush.msra.mxu0 %v277
    %298 = vmatpush.msra.mxu0 %v276
    %299 = vmatpush.msra.mxu0 %v275
    %300 = vmatpush.msra.mxu0 %v274
    %301 = vmatpush.msra.mxu0 %v273
    %302 = vmatpush.msra.mxu0 %v272
    %303 = vmatpush.msra.mxu0 %v271
    %304 = vmatpush.msra.mxu0 %v270
    %305 = vmatpush.msra.mxu0 %v269
    %306 = vmatmul.f32.gmra.mxu0 %v267
    %v307 = vpop.f32.mrf.mxu0
    %v308 = vadd.f32 %v288, %v307
    %309 = vdwg.mxu0
    %v310 = vmax.f32 %v308, 0.0
    %v311 = vld [vmem:[#allocation11] sm:$0xff]
    %v312 = vld [vmem:[#allocation11 + $0x8] sm:$0xff]
    %v313 = vld [vmem:[#allocation11 + $0x10] sm:$0xff]
    %v314 = vld [vmem:[#allocation11 + $0x18] sm:$0xff]
    %v315 = vld [vmem:[#allocation11 + $0x20] sm:$0xff]
    %v316 = vld [vmem:[#allocation11 + $0x28] sm:$0xff]
    %v317 = vld [vmem:[#allocation11 + $0x30] sm:$0xff]
    %v318 = vld [vmem:[#allocation11 + $0x38] sm:$0xff]
    %v319 = vld [vmem:[#allocation11 + $0x40] sm:$0xff]
    %v320 = vld [vmem:[#allocation11 + $0x48] sm:$0xff]
    %v321 = vld [vmem:[#allocation11 + $0x50] sm:$0xff]
    %v322 = vld [vmem:[#allocation11 + $0x58] sm:$0xff]
    %v323 = vld [vmem:[#allocation11 + $0x60] sm:$0xff]
    %v324 = vld [vmem:[#allocation11 + $0x68] sm:$0xff]
    %v325 = vld [vmem:[#allocation11 + $0x70] sm:$0xff]
    %v326 = vld [vmem:[#allocation11 + $0x78] sm:$0xff]
    %v327 = vld [vmem:[#allocation11 + $0x80] sm:$0xff]
    %v328 = vld [vmem:[#allocation11 + $0x88] sm:$0xff]
    %v329 = vld [vmem:[#allocation11 + $0x90] sm:$0xff]
    %v330 = vld [vmem:[#allocation11 + $0x98] sm:$0xff]
    %v331 = vld [vmem:[#allocation11 + $0xa0] sm:$0xff]
    %v332 = vld [vmem:[#allocation11 + $0xa8] sm:$0xff]
    %v333 = vld [vmem:[#allocation11 + $0xb0] sm:$0xff]
    %v334 = vld [vmem:[#allocation11 + $0xb8] sm:$0xff]
    %v335 = vld [vmem:[#allocation11 + $0xc0] sm:$0xff]
    %v336 = vld [vmem:[#allocation11 + $0xc8] sm:$0xff]
    %v337 = vld [vmem:[#allocation11 + $0xd0] sm:$0xff]
    %v338 = vld [vmem:[#allocation11 + $0xd8] sm:$0xff]
    %v339 = vld [vmem:[#allocation11 + $0xe0] sm:$0xff]
    %v340 = vld [vmem:[#allocation11 + $0xe8] sm:$0xff]
    %v341 = vld [vmem:[#allocation11 + $0xf0] sm:$0xff]
    %v342 = vld [vmem:[#allocation11 + $0xf8] sm:$0xff]
    %v343 = vld [vmem:[%s7] sm:$0x3]
    %v345 = vperm.slane %v343, 0
    %v346 = vperm.slane %v343, 1
    %349 = vmatpush.msra.mxu0 %v341
    %350 = vmatpush.msra.mxu0 %v339
    %351 = vmatpush.msra.mxu0 %v337
    %352 = vmatpush.msra.mxu0 %v335
    %353 = vmatpush.msra.mxu0 %v333
    %354 = vmatpush.msra.mxu0 %v331
    %355 = vmatpush.msra.mxu0 %v329
    %356 = vmatpush.msra.mxu0 %v327
    %357 = vmatpush.msra.mxu0 %v325
    %358 = vmatpush.msra.mxu0 %v323
    %359 = vmatpush.msra.mxu0 %v321
    %360 = vmatpush.msra.mxu0 %v319
    %361 = vmatpush.msra.mxu0 %v317
    %362 = vmatpush.msra.mxu0 %v315
    %363 = vmatpush.msra.mxu0 %v313
    %364 = vmatpush.msra.mxu0 %v311
    %365 = vmatmul.f32.gmra.mxu0 %v310
    %v366 = vpop.f32.mrf.mxu0
    %v367 = vadd.f32 %v345, %v366
    %368 = vdwg.mxu0
    %369 = vmatpush.msra.mxu0 %v342
    %370 = vmatpush.msra.mxu0 %v340
    %371 = vmatpush.msra.mxu0 %v338
    %372 = vmatpush.msra.mxu0 %v336
    %373 = vmatpush.msra.mxu0 %v334
    %374 = vmatpush.msra.mxu0 %v332
    %375 = vmatpush.msra.mxu0 %v330
    %376 = vmatpush.msra.mxu0 %v328
    %377 = vmatpush.msra.mxu0 %v326
    %378 = vmatpush.msra.mxu0 %v324
    %379 = vmatpush.msra.mxu0 %v322
    %380 = vmatpush.msra.mxu0 %v320
    %381 = vmatpush.msra.mxu0 %v318
    %382 = vmatpush.msra.mxu0 %v316
    %383 = vmatpush.msra.mxu0 %v314
    %384 = vmatpush.msra.mxu0 %v312
    %385 = vmatmul.f32.gmra.mxu0 %v310
    %v386 = vpop.f32.mrf.mxu0
    %v387 = vadd.f32 %v346, %v386
    %388 = vdwg.mxu0
    %v389 = vmul.f32 %v387, 0.5
    %v390 = vmul.f32 %v389, 1.442695
    %v391 = vpow.pop %v390
    %v392 = vld [vmem:[#allocation5] sm:$0xff]
    %v393 = vmul.f32 %v391, %v392
    %v394 = vadd.f32 %v367, %v393
    %v395 = vld [vmem:[#allocation13] sm:$0xff]
    %v396 = vld [vmem:[#allocation13 + $0x8] sm:$0xff]
    %v397 = vld [vmem:[#allocation13 + $0x10] sm:$0xff]
    %v398 = vld [vmem:[#allocation13 + $0x18] sm:$0xff]
    %v399 = vld [vmem:[#allocation13 + $0x20] sm:$0xff]
    %v400 = vld [vmem:[#allocation13 + $0x28] sm:$0xff]
    %v401 = vld [vmem:[#allocation13 + $0x30] sm:$0xff]
    %v402 = vld [vmem:[#allocation13 + $0x38] sm:$0xff]
    %v403 = vld [vmem:[#allocation13 + $0x40] sm:$0xff]
    %v404 = vld [vmem:[#allocation13 + $0x48] sm:$0xff]
    %v405 = vld [vmem:[#allocation13 + $0x50] sm:$0xff]
    %v406 = vld [vmem:[#allocation13 + $0x58] sm:$0xff]
    %v407 = vld [vmem:[#allocation13 + $0x60] sm:$0xff]
    %v408 = vld [vmem:[#allocation13 + $0x68] sm:$0xff]
    %v409 = vld [vmem:[#allocation13 + $0x70] sm:$0xff]
    %v410 = vld [vmem:[#allocation13 + $0x78] sm:$0xff]
    %v411 = vld [vmem:[%s9] sm:$0x1]
    %v413 = vperm.slane %v411, 0
    %415 = vmatpush.msra.mxu0 %v410
    %416 = vmatpush.msra.mxu0 %v409
    %417 = vmatpush.msra.mxu0 %v408
    %418 = vmatpush.msra.mxu0 %v407
    %419 = vmatpush.msra.mxu0 %v406
    %420 = vmatpush.msra.mxu0 %v405
    %421 = vmatpush.msra.mxu0 %v404
    %422 = vmatpush.msra.mxu0 %v403
    %423 = vmatpush.msra.mxu0 %v402
    %424 = vmatpush.msra.mxu0 %v401
    %425 = vmatpush.msra.mxu0 %v400
    %426 = vmatpush.msra.mxu0 %v399
    %427 = vmatpush.msra.mxu0 %v398
    %428 = vmatpush.msra.mxu0 %v397
    %429 = vmatpush.msra.mxu0 %v396
    %430 = vmatpush.msra.mxu0 %v395
    %431 = vmatmul.f32.gmra.mxu0 %v394
    %v432 = vpop.f32.mrf.mxu0
    %v433 = vadd.f32 %v413, %v432
    %434 = vdwg.mxu0
    %v435 = vmax.f32 %v433, 0.0
    %v436 = vld [vmem:[#allocation14] sm:$0xff]
    %v437 = vld [vmem:[#allocation14 + $0x8] sm:$0xff]
    %v438 = vld [vmem:[#allocation14 + $0x10] sm:$0xff]
    %v439 = vld [vmem:[#allocation14 + $0x18] sm:$0xff]
    %v440 = vld [vmem:[#allocation14 + $0x20] sm:$0xff]
    %v441 = vld [vmem:[#allocation14 + $0x28] sm:$0xff]
    %v442 = vld [vmem:[#allocation14 + $0x30] sm:$0xff]
    %v443 = vld [vmem:[#allocation14 + $0x38] sm:$0xff]
    %v444 = vld [vmem:[#allocation14 + $0x40] sm:$0xff]
    %v445 = vld [vmem:[#allocation14 + $0x48] sm:$0xff]
    %v446 = vld [vmem:[#allocation14 + $0x50] sm:$0xff]
    %v447 = vld [vmem:[#allocation14 + $0x58] sm:$0xff]
    %v448 = vld [vmem:[#allocation14 + $0x60] sm:$0xff]
    %v449 = vld [vmem:[#allocation14 + $0x68] sm:$0xff]
    %v450 = vld [vmem:[#allocation14 + $0x70] sm:$0xff]
    %v451 = vld [vmem:[#allocation14 + $0x78] sm:$0xff]
    %v452 = vld [vmem:[%s11] sm:$0x1]
    %v454 = vperm.slane %v452, 0
    %456 = vmatpush.msra.mxu0 %v451
    %457 = vmatpush.msra.mxu0 %v450
    %458 = vmatpush.msra.mxu0 %v449
    %459 = vmatpush.msra.mxu0 %v448
    %460 = vmatpush.msra.mxu0 %v447
    %461 = vmatpush.msra.mxu0 %v446
    %462 = vmatpush.msra.mxu0 %v445
    %463 = vmatpush.msra.mxu0 %v444
    %464 = vmatpush.msra.mxu0 %v443
    %465 = vmatpush.msra.mxu0 %v442
    %466 = vmatpush.msra.mxu0 %v441
    %467 = vmatpush.msra.mxu0 %v440
    %468 = vmatpush.msra.mxu0 %v439
    %469 = vmatpush.msra.mxu0 %v438
    %470 = vmatpush.msra.mxu0 %v437
    %471 = vmatpush.msra.mxu0 %v436
    %472 = vmatmul.f32.gmra.mxu0 %v435
    %v473 = vpop.f32.mrf.mxu0
    %v474 = vadd.f32 %v454, %v473
    %475 = vdwg.mxu0
    %v476 = vmax.f32 %v474, 0.0
    %s477 = scalar_lea.vmem [#allocation14], 128
    %v478 = vld [vmem:[%s477] sm:$0xff]
    %v479 = vld [vmem:[%s477 + $0x8] sm:$0xff]
    %v480 = vld [vmem:[%s477 + $0x10] sm:$0xff]
    %v481 = vld [vmem:[%s477 + $0x18] sm:$0xff]
    %v482 = vld [vmem:[%s477 + $0x20] sm:$0xff]
    %v483 = vld [vmem:[%s477 + $0x28] sm:$0xff]
    %v484 = vld [vmem:[%s477 + $0x30] sm:$0xff]
    %v485 = vld [vmem:[%s477 + $0x38] sm:$0xff]
    %v486 = vld [vmem:[%s477 + $0x40] sm:$0xff]
    %v487 = vld [vmem:[%s477 + $0x48] sm:$0xff]
    %v488 = vld [vmem:[%s477 + $0x50] sm:$0xff]
    %v489 = vld [vmem:[%s477 + $0x58] sm:$0xff]
    %v490 = vld [vmem:[%s477 + $0x60] sm:$0xff]
    %v491 = vld [vmem:[%s477 + $0x68] sm:$0xff]
    %v492 = vld [vmem:[%s477 + $0x70] sm:$0xff]
    %v493 = vld [vmem:[%s477 + $0x78] sm:$0xff]
    %s494 = scalar_lea.vmem %s11, 1
    %v495 = vld [vmem:[%s494] sm:$0x1]
    %v497 = vperm.slane %v495, 0
    %499 = vmatpush.msra.mxu0 %v493
    %500 = vmatpush.msra.mxu0 %v492
    %501 = vmatpush.msra.mxu0 %v491
    %502 = vmatpush.msra.mxu0 %v490
    %503 = vmatpush.msra.mxu0 %v489
    %504 = vmatpush.msra.mxu0 %v488
    %505 = vmatpush.msra.mxu0 %v487
    %506 = vmatpush.msra.mxu0 %v486
    %507 = vmatpush.msra.mxu0 %v485
    %508 = vmatpush.msra.mxu0 %v484
    %509 = vmatpush.msra.mxu0 %v483
    %510 = vmatpush.msra.mxu0 %v482
    %511 = vmatpush.msra.mxu0 %v481
    %512 = vmatpush.msra.mxu0 %v480
    %513 = vmatpush.msra.mxu0 %v479
    %514 = vmatpush.msra.mxu0 %v478
    %515 = vmatmul.f32.gmra.mxu0 %v476
    %v516 = vpop.f32.mrf.mxu0
    %v517 = vadd.f32 %v497, %v516
    %518 = vdwg.mxu0
    %v519 = vmax.f32 %v517, 0.0
    %v520 = vld [vmem:[#allocation16] sm:$0xff]
    %v521 = vld [vmem:[#allocation16 + $0x8] sm:$0xff]
    %v522 = vld [vmem:[#allocation16 + $0x10] sm:$0xff]
    %v523 = vld [vmem:[#allocation16 + $0x18] sm:$0xff]
    %v524 = vld [vmem:[#allocation16 + $0x20] sm:$0xff]
    %v525 = vld [vmem:[#allocation16 + $0x28] sm:$0xff]
    %v526 = vld [vmem:[#allocation16 + $0x30] sm:$0xff]
    %v527 = vld [vmem:[#allocation16 + $0x38] sm:$0xff]
    %v528 = vld [vmem:[#allocation16 + $0x40] sm:$0xff]
    %v529 = vld [vmem:[#allocation16 + $0x48] sm:$0xff]
    %v530 = vld [vmem:[#allocation16 + $0x50] sm:$0xff]
    %v531 = vld [vmem:[#allocation16 + $0x58] sm:$0xff]
    %v532 = vld [vmem:[#allocation16 + $0x60] sm:$0xff]
    %v533 = vld [vmem:[#allocation16 + $0x68] sm:$0xff]
    %v534 = vld [vmem:[#allocation16 + $0x70] sm:$0xff]
    %v535 = vld [vmem:[#allocation16 + $0x78] sm:$0xff]
    %v536 = vld [vmem:[%s13] sm:$0x1]
    %v538 = vperm.slane %v536, 0
    %540 = vmatpush.msra.mxu0 %v535
    %541 = vmatpush.msra.mxu0 %v534
    %542 = vmatpush.msra.mxu0 %v533
    %543 = vmatpush.msra.mxu0 %v532
    %544 = vmatpush.msra.mxu0 %v531
    %545 = vmatpush.msra.mxu0 %v530
    %546 = vmatpush.msra.mxu0 %v529
    %547 = vmatpush.msra.mxu0 %v528
    %548 = vmatpush.msra.mxu0 %v527
    %549 = vmatpush.msra.mxu0 %v526
    %550 = vmatpush.msra.mxu0 %v525
    %551 = vmatpush.msra.mxu0 %v524
    %552 = vmatpush.msra.mxu0 %v523
    %553 = vmatpush.msra.mxu0 %v522
    %554 = vmatpush.msra.mxu0 %v521
    %555 = vmatpush.msra.mxu0 %v520
    %556 = vmatmul.f32.gmra.mxu0 %v519
    %v557 = vpop.f32.mrf.mxu0
    %v558 = vadd.f32 %v538, %v557
    %559 = vdwg.mxu0
    %v560 = vxor.u32 %v558, 2147483648
    %v561 = vmul.f32 %v560, 1.442695
    %v562 = vpow.pop %v561
    %v563 = vadd.f32 %v562, 1.0
    %v564 = vrcp.pop %v563
    %v565 = vmul.f32 %v563, %v564
    %v566 = vsub.f32 1.0, %v565
    %v567 = vmul.f32 %v564, %v566
    %v568 = vadd.f32 %v564, %v567
    %vm569 = vweird.f32 %v563
    %vm570 = vweird.f32 %v564
    %vm571 = vmor %vm569, %vm570
    %v572 = vsel %vm571, %v564, %v568
    %v573 = vand.u32 2147483647, %v563
    %vm574 = vcmp.eq.f32.partialorder %v573, 8.507059e+37
    %v575 = vand.u32 %v563, 2147483648
    %v576 = vor.u32 1.1754944e-38, %v575
    %v577 = vsel %vm574, %v576, %v572
    %v578 = vmul.f32 1.0, %v577
    %579 = vst [vmem:[#allocation17] sm:$0xff] %v578
    %580 = vst [vmem:[#allocation18] sm:$0xff] %v367
    %581 = vst [vmem:[#allocation18 + $0x8] sm:$0xff] %v387
    %582 = vst [vmem:[#allocation18 + $0x10] sm:$0xff] %v394
    // Predicated region
    $region94: #{tpu_custom_call.1} parent=1 // pred_check
      _
    $region95: #{tpu_custom_call.1} parent=1 // pred_check_branch
      %584 = sbr.rel (0) target = $region97
    $region96: #{tpu_custom_call.1} parent=1 // pred_region
      %586 = vsyncadd [#allocation4], 0
      %s588 = sshll.u32 [#allocation17], 4
      %s589 = int_to_ptr.vmem [resolvable:$true] %s588
      %s590 = sshll.u32 %s14, 4
      %s591 = int_to_ptr.hbm [resolvable:$true] %s590
      %593 = dma.vmem_to_hbm [thread:$0]  %s589, 128, %s591, [#allocation4]
    $region97: #{tpu_custom_call.1} parent=1 // pred_fallthru
      _
    // Predicated region
    $region98: #{tpu_custom_call.1} parent=1 // pred_check
      _
    $region99: #{tpu_custom_call.1} parent=1 // pred_check_branch
      %595 = sbr.rel (0) target = $region101
    $region100: #{tpu_custom_call.1} parent=1 // pred_region
      %597 = vsyncadd [#allocation19], 0
      %s599 = sshll.u32 [#allocation18], 4
      %s600 = int_to_ptr.vmem [resolvable:$true] %s599
      %s601 = sshll.u32 %s15, 4
      %s602 = int_to_ptr.hbm [resolvable:$true] %s601
      %604 = dma.vmem_to_hbm [thread:$0]  %s600, 384, %s602, [#allocation19]
    $region101: #{tpu_custom_call.1} parent=1 // pred_fallthru
      _
    // Predicated region
    $region102: #{tpu_custom_call.1} parent=1 // pred_check
      _
    $region103: #{tpu_custom_call.1} parent=1 // pred_check_branch
      %606 = sbr.rel (0) target = $region105
    $region104: #{tpu_custom_call.1} parent=1 // pred_region
      %608 = dma.done [#allocation4], 128
    $region105: #{tpu_custom_call.1} parent=1 // pred_fallthru
      _
    // Predicated region
    $region106: #{tpu_custom_call.1} parent=1 // pred_check
      _
    $region107: #{tpu_custom_call.1} parent=1 // pred_check_branch
      %610 = sbr.rel (0) target = $region109
    $region108: #{tpu_custom_call.1} parent=1 // pred_region
      %612 = dma.done [#allocation19], 384
    $region109: #{tpu_custom_call.1} parent=1 // pred_fallthru
      _
    %613 = vsyncpa [#allocation3], 1
    %614 = vsyncpa [#allocation6], 1
    %615 = vsyncpa [#allocation9], 1
    %616 = vsyncpa [#allocation12], 1
    %617 = vsyncpa [#allocation15], 1
    %618 = vsyncpa [#allocation4], 1
    %619 = vsyncpa [#allocation19], 1

</llo_original>
